<compile_context>
chip_gen: v6e
topology: v6e:2x2x1
jax: 0.10.0
libtpu: 0.0.40
codegen_flags: <defaults>
</compile_context>

<pallas_src>
import jax
import jax.numpy as jnp
from jax.experimental import pallas as pl
from jax.experimental.pallas import tpu as pltpu

HIDDEN = 20
INPUT = 1
NUM_LAYERS = 2   # hard-wired as two explicit LSTM cells in the kernel
OUTPUT = 15


def _lstm_kernel(x_ref,       # (B, T, I)  f32  raw batch-first input
                 w_ih0_ref,   # (I, 4H)    f32  layer-0 input weight (gate order i,f,o,g)
                 b0_ref,      # (1, 4H)    f32  layer-0 folded bias
                 w_hh0_ref,   # (H, 4H)    bf16 layer-0 recurrent weight
                 w_ih1_ref,   # (H, 4H)    bf16 layer-1 input weight
                 w_hh1_ref,   # (H, 4H)    bf16 layer-1 recurrent weight
                 b1_ref,      # (1, 4H)    f32  layer-1 folded bias
                 w_fc_ref,    # (H, O)     bf16 final Linear weight
                 b_fc_ref,    # (1, O)     f32  final Linear bias
                 out_ref):    # (B, O)     f32
    B, T, _ = x_ref.shape
    H = HIDDEN
    bf16 = jnp.bfloat16

    # Tiny weights: load once, stay resident in vregs/VMEM for the whole recurrence.
    w_hh0 = w_hh0_ref[...]
    w_ih1 = w_ih1_ref[...]
    w_hh1 = w_hh1_ref[...]

    # Hoisted bias broadcasts (JAX does not CSE broadcast_in_dim: do them once, not T times).
    b1 = jnp.broadcast_to(b1_ref[...], (B, 4 * H))
    b_fc = jnp.broadcast_to(b_fc_ref[...], (B, OUTPUT))

    # Fused layer-0 input projection prologue: INPUT == 1 means this is a single
    # broadcast-FMA producing (B, T, 4H) with the bias already folded in; it is entirely
    # off the serial dependent chain of the recurrence.
    xproj = x_ref[...] * w_ih0_ref[...][None] + b0_ref[...][None]

    def activation(gates, c):
        # Gate columns repacked at pack time to (i, f, o, g): one sigmoid over the first 3H
        # lanes + one tanh over the last H lanes.
        s = jax.nn.sigmoid(gates[:, :3 * H])
        i_g = s[:, 0 * H:1 * H]
        f_g = s[:, 1 * H:2 * H]
        o_g = s[:, 2 * H:3 * H]
        g_g = jnp.tanh(gates[:, 3 * H:])
        c_new = f_g * c + i_g * g_g
        h_new = o_g * jnp.tanh(c_new)
        return h_new, c_new

    h0 = c0 = h1 = c1 = jnp.zeros((B, H), jnp.float32)

    # T is static and small (8): a fully-unrolled Python loop keeps every slice static and
    # gives the scheduler full visibility.  For large T switch to a partially unrolled
    # lax.fori_loop (full unroll only blows instruction memory there).
    for t in range(T):
        # Layer 0: only the recurrent matmul remains on the dependent chain (bf16 operands,
        # f32 accumulation).
        g0 = xproj[:, t, :] + jnp.dot(h0.astype(bf16), w_hh0,
                                      preferred_element_type=jnp.float32)
        h0, c0 = activation(g0, c0)

        # Layer 1: two independent MXU dots instead of concat + one dot (no lane-roll/select
        # on the critical path; the two pushes pipeline back-to-back).
        g1 = (jnp.dot(h0.astype(bf16), w_ih1, preferred_element_type=jnp.float32)
              + jnp.dot(h1.astype(bf16), w_hh1, preferred_element_type=jnp.float32)
              + b1)
        h1, c1 = activation(g1, c1)

    # Final Linear applied to the last timestep's top-layer hidden state.
    out_ref[...] = jnp.dot(h1.astype(bf16), w_fc_ref[...],
                           preferred_element_type=jnp.float32) + b_fc


def lstm_forward(x, params):
    """x: (B, T, I) float32, batch-first (PyTorch layout). Returns (B, OUTPUT) float32."""
    B, T, I = x.shape
    H, O = HIDDEN, OUTPUT
    x = x.astype(jnp.float32)

    args = (x, params["w_ih0"], params["b0"], params["w_hh0"], params["w_ih1"],
            params["w_hh1"], params["b1"], params["w_fc"], params["b_fc"])

    # Advisory cost hint: the kernel is tiny and latency-bound; this just keeps XLA's
    # scheduler from mis-ranking the custom call.
    flops = 2 * B * T * 3 * H * 4 * H + 2 * B * H * O + 2 * B * T * I * 4 * H
    transcendentals = B * T * NUM_LAYERS * 5 * H
    bytes_accessed = sum(int(a.size) * a.dtype.itemsize for a in args) + B * O * 4

    # Single gridless invocation, whole-array VMEM blocks: total footprint ~10 KB, so there
    # is nothing to double-buffer and a per-timestep grid would only add ~0.35 us/step of
    # bookkeeping.  (If batch ever grows, add a leading "parallel" batch grid axis so v7x's
    # second TensorCore shares the work.)
    return pl.pallas_call(
        _lstm_kernel,
        out_shape=jax.ShapeDtypeStruct((B, O), jnp.float32),
        in_specs=[pl.BlockSpec(memory_space=pltpu.MemorySpace.VMEM)] * len(args),
        out_specs=pl.BlockSpec(memory_space=pltpu.MemorySpace.VMEM),
        cost_estimate=pl.CostEstimate(flops=flops,
                                      transcendentals=transcendentals,
                                      bytes_accessed=bytes_accessed),
    )(*args)


def init_torch_params(key):
    """Deterministic synthetic init with PyTorch nn.LSTM / nn.Linear shapes & gate order."""
    k = 1.0 / float(jnp.sqrt(HIDDEN))
    keys = jax.random.split(key, 10)

    def u(kk, shape):
        return jax.random.uniform(kk, shape, jnp.float32, -k, k)

    return dict(
        w_ih0=u(keys[0], (4 * HIDDEN, INPUT)),
        w_hh0=u(keys[1], (4 * HIDDEN, HIDDEN)),
        b_ih0=u(keys[2], (4 * HIDDEN,)),
        b_hh0=u(keys[3], (4 * HIDDEN,)),
        w_ih1=u(keys[4], (4 * HIDDEN, HIDDEN)),
        w_hh1=u(keys[5], (4 * HIDDEN, HIDDEN)),
        b_ih1=u(keys[6], (4 * HIDDEN,)),
        b_hh1=u(keys[7], (4 * HIDDEN,)),
        w_fc=u(keys[8], (OUTPUT, HIDDEN)),
        b_fc=u(keys[9], (OUTPUT,)),
    )


def _reorder_gates(w):
    """PyTorch gate order (i, f, g, o) -> kernel gate order (i, f, o, g) along the 4H axis."""
    i, f, g, o = jnp.split(w, 4, axis=0)
    return jnp.concatenate([i, f, o, g], axis=0)


def pack_params(pt):
    """Glue: transpose, reorder gates, fold bias pairs, pre-cast MXU-side weights to bf16
    (elementwise/activation math in the kernel stays f32)."""
    bf16 = jnp.bfloat16
    return dict(
        w_ih0=_reorder_gates(pt["w_ih0"]).T,                        # (I, 4H)  f32
        b0=_reorder_gates(pt["b_ih0"] + pt["b_hh0"])[None, :],      # (1, 4H)  f32
        w_hh0=_reorder_gates(pt["w_hh0"]).T.astype(bf16),           # (H, 4H)  bf16
        w_ih1=_reorder_gates(pt["w_ih1"]).T.astype(bf16),           # (H, 4H)  bf16
        w_hh1=_reorder_gates(pt["w_hh1"]).T.astype(bf16),           # (H, 4H)  bf16
        b1=_reorder_gates(pt["b_ih1"] + pt["b_hh1"])[None, :],      # (1, 4H)  f32
        w_fc=pt["w_fc"].T.astype(bf16),                             # (H, O)   bf16
        b_fc=pt["b_fc"][None, :],                                   # (1, O)   f32
    )


def _ref_cell_act(g, c, H):
    i = jax.nn.sigmoid(g[:, :H])
    f = jax.nn.sigmoid(g[:, H:2 * H])
    gg = jnp.tanh(g[:, 2 * H:3 * H])
    o = jax.nn.sigmoid(g[:, 3 * H:])
    c_new = f * c + i * gg
    return o * jnp.tanh(c_new), c_new


def lstm_ref(x, pt):
    """Exact f32 reference of the PyTorch forward pass (PyTorch layout, gate order i,f,g,o)."""
    B, T, _ = x.shape
    H = HIDDEN
    hi = jax.lax.Precision.HIGHEST
    h0 = c0 = h1 = c1 = jnp.zeros((B, H), jnp.float32)

    def cell(x_in, h, c, w_ih, w_hh, b_ih, b_hh):
        g = (jnp.dot(x_in, w_ih.T, precision=hi) + jnp.dot(h, w_hh.T, precision=hi)
             + b_ih + b_hh)
        return _ref_cell_act(g, c, H)

    for t in range(T):
        x_in = x[:, t, :]
        h0, c0 = cell(x_in, h0, c0, pt["w_ih0"], pt["w_hh0"], pt["b_ih0"], pt["b_hh0"])
        h1, c1 = cell(h0, h1, c1, pt["w_ih1"], pt["w_hh1"], pt["b_ih1"], pt["b_hh1"])
    return jnp.dot(h1, pt["w_fc"].T, precision=hi) + pt["b_fc"]


def lstm_ref_bf16(x, pt):
    """Reference emulating the kernel's mixed precision: matmul operands rounded to bf16
    (f32 accumulation), everything else in f32.  Used for the tight numerical check."""
    B, T, _ = x.shape
    H = HIDDEN
    hi = jax.lax.Precision.HIGHEST

    def bf(a):
        return a.astype(jnp.bfloat16).astype(jnp.float32)

    h0 = c0 = h1 = c1 = jnp.zeros((B, H), jnp.float32)
    for t in range(T):
        x_in = x[:, t, :]
        g0 = (jnp.dot(x_in, pt["w_ih0"].T, precision=hi)
              + jnp.dot(bf(h0), bf(pt["w_hh0"]).T, precision=hi)
              + pt["b_ih0"] + pt["b_hh0"])
        h0, c0 = _ref_cell_act(g0, c0, H)
        g1 = (jnp.dot(bf(h0), bf(pt["w_ih1"]).T, precision=hi)
              + jnp.dot(bf(h1), bf(pt["w_hh1"]).T, precision=hi)
              + pt["b_ih1"] + pt["b_hh1"])
        h1, c1 = _ref_cell_act(g1, c1, H)
    return jnp.dot(bf(h1), bf(pt["w_fc"]).T, precision=hi) + pt["b_fc"]


if __name__ == "__main__":
    key = jax.random.PRNGKey(0)
    k_x, k_p = jax.random.split(key)

    B, T = 2, 8
    x = jax.random.normal(k_x, (B, T, INPUT), jnp.float32)  # (batch, seq, input_size)

    torch_params = init_torch_params(k_p)
    params = pack_params(torch_params)

    out = jax.jit(lstm_forward)(x, params)
    out = jax.block_until_ready(out)
    assert out.shape == (B, OUTPUT), out.shape

    # Tight check: reference that emulates the kernel's mixed precision (bf16 MXU operands,
    # f32 accumulation/elementwise) -- verifies the kernel math itself.
    ref_bf16 = lstm_ref_bf16(x, torch_params)
    assert jnp.allclose(out, ref_bf16, atol=1e-3, rtol=1e-3), (out, ref_bf16)

    # Loose check: exact f32 PyTorch-semantics reference (bf16 MXU operands cost at most a
    # few 1e-3 of absolute error at this scale).
    ref_f32 = lstm_ref(x, torch_params)
    assert jnp.allclose(out, ref_f32, atol=2e-2, rtol=2e-2), (out, ref_f32)

    print("KERNEL_OK")
</pallas_src>

<mosaic_0001>
module attributes {stable_mosaic.version = 11 : i64} {
  func.func @_lstm_kernel(%arg0: memref<2x8x1xf32, #tpu.memory_space<vmem>>, %arg1: memref<1x80xf32, #tpu.memory_space<vmem>>, %arg2: memref<1x80xf32, #tpu.memory_space<vmem>>, %arg3: memref<20x80xbf16, #tpu.memory_space<vmem>>, %arg4: memref<20x80xbf16, #tpu.memory_space<vmem>>, %arg5: memref<20x80xbf16, #tpu.memory_space<vmem>>, %arg6: memref<1x80xf32, #tpu.memory_space<vmem>>, %arg7: memref<20x15xbf16, #tpu.memory_space<vmem>>, %arg8: memref<1x15xf32, #tpu.memory_space<vmem>>, %arg9: memref<2x15xf32, #tpu.memory_space<vmem>>) attributes {dimension_semantics = [], scalar_prefetch = 0 : i64, scratch_operands = 0 : i64, tpu.core_type = #tpu.core_type<tc>} {
    %c0 = arith.constant 0 : index
    %c0_0 = arith.constant 0 : index
    %0 = vector.load %arg3[%c0, %c0_0] : memref<20x80xbf16, #tpu.memory_space<vmem>>, vector<20x80xbf16>
    %c0_1 = arith.constant 0 : index
    %c0_2 = arith.constant 0 : index
    %1 = vector.load %arg4[%c0_1, %c0_2] : memref<20x80xbf16, #tpu.memory_space<vmem>>, vector<20x80xbf16>
    %c0_3 = arith.constant 0 : index
    %c0_4 = arith.constant 0 : index
    %2 = vector.load %arg5[%c0_3, %c0_4] : memref<20x80xbf16, #tpu.memory_space<vmem>>, vector<20x80xbf16>
    %c0_5 = arith.constant 0 : index
    %c0_6 = arith.constant 0 : index
    %3 = vector.load %arg6[%c0_5, %c0_6] : memref<1x80xf32, #tpu.memory_space<vmem>>, vector<1x80xf32>
    %4 = vector.shape_cast %3 : vector<1x80xf32> to vector<1x80xf32>
    %5 = vector.broadcast %4 : vector<1x80xf32> to vector<2x80xf32>
    %c0_7 = arith.constant 0 : index
    %c0_8 = arith.constant 0 : index
    %6 = vector.load %arg8[%c0_7, %c0_8] : memref<1x15xf32, #tpu.memory_space<vmem>>, vector<1x15xf32>
    %7 = vector.shape_cast %6 : vector<1x15xf32> to vector<1x15xf32>
    %8 = vector.broadcast %7 : vector<1x15xf32> to vector<2x15xf32>
    %c0_9 = arith.constant 0 : index
    %c0_10 = arith.constant 0 : index
    %c0_11 = arith.constant 0 : index
    %9 = vector.load %arg0[%c0_9, %c0_10, %c0_11] : memref<2x8x1xf32, #tpu.memory_space<vmem>>, vector<2x8x1xf32>
    %c0_12 = arith.constant 0 : index
    %c0_13 = arith.constant 0 : index
    %10 = vector.load %arg1[%c0_12, %c0_13] : memref<1x80xf32, #tpu.memory_space<vmem>>, vector<1x80xf32>
    %11 = vector.shape_cast %10 : vector<1x80xf32> to vector<1x1x80xf32>
    %12 = vector.broadcast %9 : vector<2x8x1xf32> to vector<2x8x80xf32>
    %13 = vector.broadcast %11 : vector<1x1x80xf32> to vector<2x8x80xf32>
    %14 = arith.mulf %12, %13 : vector<2x8x80xf32>
    %c0_14 = arith.constant 0 : index
    %c0_15 = arith.constant 0 : index
    %15 = vector.load %arg2[%c0_14, %c0_15] : memref<1x80xf32, #tpu.memory_space<vmem>>, vector<1x80xf32>
    %16 = vector.shape_cast %15 : vector<1x80xf32> to vector<1x1x80xf32>
    %17 = vector.broadcast %16 : vector<1x1x80xf32> to vector<2x8x80xf32>
    %18 = arith.addf %14, %17 : vector<2x8x80xf32>
    %cst = arith.constant 0.000000e+00 : f32
    %19 = vector.broadcast %cst : f32 to vector<2x20xf32>
    %20 = vector.extract_strided_slice %18 {offsets = [0, 0, 0], sizes = [2, 1, 80], strides = [1, 1, 1]} : vector<2x8x80xf32> to vector<2x1x80xf32>
    %21 = vector.shape_cast %20 : vector<2x1x80xf32> to vector<2x80xf32>
    %22 = arith.truncf %19 : vector<2x20xf32> to vector<2x20xbf16>
    %cst_16 = arith.constant dense<0.000000e+00> : vector<2x80xf32>
    %23 = tpu.matmul %22, %0, %cst_16 {dimension_numbers = #tpu.dot_dimension_numbers<[1], [0], [0], [1], [0, 0, 1, 1], [], []>} : vector<2x20xbf16>, vector<20x80xbf16>, vector<2x80xf32> -> vector<2x80xf32>
    %24 = arith.addf %21, %23 : vector<2x80xf32>
    %25 = vector.extract_strided_slice %24 {offsets = [0, 0], sizes = [2, 60], strides = [1, 1]} : vector<2x80xf32> to vector<2x60xf32>
    %26 = arith.negf %25 : vector<2x60xf32>
    %27 = math.exp %26 : vector<2x60xf32>
    %cst_17 = arith.constant 1.000000e+00 : f32
    %28 = vector.broadcast %cst_17 : f32 to vector<2x60xf32>
    %29 = arith.addf %28, %27 : vector<2x60xf32>
    %30 = arith.divf %28, %29 : vector<2x60xf32>
    %31 = vector.extract_strided_slice %30 {offsets = [0, 0], sizes = [2, 20], strides = [1, 1]} : vector<2x60xf32> to vector<2x20xf32>
    %32 = vector.extract_strided_slice %30 {offsets = [0, 20], sizes = [2, 20], strides = [1, 1]} : vector<2x60xf32> to vector<2x20xf32>
    %33 = vector.extract_strided_slice %30 {offsets = [0, 40], sizes = [2, 20], strides = [1, 1]} : vector<2x60xf32> to vector<2x20xf32>
    %34 = vector.extract_strided_slice %24 {offsets = [0, 60], sizes = [2, 20], strides = [1, 1]} : vector<2x80xf32> to vector<2x20xf32>
    %35 = math.tanh %34 : vector<2x20xf32>
    %36 = arith.mulf %32, %19 : vector<2x20xf32>
    %37 = arith.mulf %31, %35 : vector<2x20xf32>
    %38 = arith.addf %36, %37 : vector<2x20xf32>
    %39 = math.tanh %38 : vector<2x20xf32>
    %40 = arith.mulf %33, %39 : vector<2x20xf32>
    %41 = arith.truncf %40 : vector<2x20xf32> to vector<2x20xbf16>
    %cst_18 = arith.constant dense<0.000000e+00> : vector<2x80xf32>
    %42 = tpu.matmul %41, %1, %cst_18 {dimension_numbers = #tpu.dot_dimension_numbers<[1], [0], [0], [1], [0, 0, 1, 1], [], []>} : vector<2x20xbf16>, vector<20x80xbf16>, vector<2x80xf32> -> vector<2x80xf32>
    %43 = arith.truncf %19 : vector<2x20xf32> to vector<2x20xbf16>
    %cst_19 = arith.constant dense<0.000000e+00> : vector<2x80xf32>
    %44 = tpu.matmul %43, %2, %cst_19 {dimension_numbers = #tpu.dot_dimension_numbers<[1], [0], [0], [1], [0, 0, 1, 1], [], []>} : vector<2x20xbf16>, vector<20x80xbf16>, vector<2x80xf32> -> vector<2x80xf32>
    %45 = arith.addf %42, %44 : vector<2x80xf32>
    %46 = arith.addf %45, %5 : vector<2x80xf32>
    %47 = vector.extract_strided_slice %46 {offsets = [0, 0], sizes = [2, 60], strides = [1, 1]} : vector<2x80xf32> to vector<2x60xf32>
    %48 = arith.negf %47 : vector<2x60xf32>
    %49 = math.exp %48 : vector<2x60xf32>
    %cst_20 = arith.constant 1.000000e+00 : f32
    %50 = vector.broadcast %cst_20 : f32 to vector<2x60xf32>
    %51 = arith.addf %50, %49 : vector<2x60xf32>
    %52 = arith.divf %50, %51 : vector<2x60xf32>
    %53 = vector.extract_strided_slice %52 {offsets = [0, 0], sizes = [2, 20], strides = [1, 1]} : vector<2x60xf32> to vector<2x20xf32>
    %54 = vector.extract_strided_slice %52 {offsets = [0, 20], sizes = [2, 20], strides = [1, 1]} : vector<2x60xf32> to vector<2x20xf32>
    %55 = vector.extract_strided_slice %52 {offsets = [0, 40], sizes = [2, 20], strides = [1, 1]} : vector<2x60xf32> to vector<2x20xf32>
    %56 = vector.extract_strided_slice %46 {offsets = [0, 60], sizes = [2, 20], strides = [1, 1]} : vector<2x80xf32> to vector<2x20xf32>
    %57 = math.tanh %56 : vector<2x20xf32>
    %58 = arith.mulf %54, %19 : vector<2x20xf32>
    %59 = arith.mulf %53, %57 : vector<2x20xf32>
    %60 = arith.addf %58, %59 : vector<2x20xf32>
    %61 = math.tanh %60 : vector<2x20xf32>
    %62 = arith.mulf %55, %61 : vector<2x20xf32>
    %63 = vector.extract_strided_slice %18 {offsets = [0, 1, 0], sizes = [2, 1, 80], strides = [1, 1, 1]} : vector<2x8x80xf32> to vector<2x1x80xf32>
    %64 = vector.shape_cast %63 : vector<2x1x80xf32> to vector<2x80xf32>
    %65 = arith.truncf %40 : vector<2x20xf32> to vector<2x20xbf16>
    %cst_21 = arith.constant dense<0.000000e+00> : vector<2x80xf32>
    %66 = tpu.matmul %65, %0, %cst_21 {dimension_numbers = #tpu.dot_dimension_numbers<[1], [0], [0], [1], [0, 0, 1, 1], [], []>} : vector<2x20xbf16>, vector<20x80xbf16>, vector<2x80xf32> -> vector<2x80xf32>
    %67 = arith.addf %64, %66 : vector<2x80xf32>
    %68 = vector.extract_strided_slice %67 {offsets = [0, 0], sizes = [2, 60], strides = [1, 1]} : vector<2x80xf32> to vector<2x60xf32>
    %69 = arith.negf %68 : vector<2x60xf32>
    %70 = math.exp %69 : vector<2x60xf32>
    %cst_22 = arith.constant 1.000000e+00 : f32
    %71 = vector.broadcast %cst_22 : f32 to vector<2x60xf32>
    %72 = arith.addf %71, %70 : vector<2x60xf32>
    %73 = arith.divf %71, %72 : vector<2x60xf32>
    %74 = vector.extract_strided_slice %73 {offsets = [0, 0], sizes = [2, 20], strides = [1, 1]} : vector<2x60xf32> to vector<2x20xf32>
    %75 = vector.extract_strided_slice %73 {offsets = [0, 20], sizes = [2, 20], strides = [1, 1]} : vector<2x60xf32> to vector<2x20xf32>
    %76 = vector.extract_strided_slice %73 {offsets = [0, 40], sizes = [2, 20], strides = [1, 1]} : vector<2x60xf32> to vector<2x20xf32>
    %77 = vector.extract_strided_slice %67 {offsets = [0, 60], sizes = [2, 20], strides = [1, 1]} : vector<2x80xf32> to vector<2x20xf32>
    %78 = math.tanh %77 : vector<2x20xf32>
    %79 = arith.mulf %75, %38 : vector<2x20xf32>
    %80 = arith.mulf %74, %78 : vector<2x20xf32>
    %81 = arith.addf %79, %80 : vector<2x20xf32>
    %82 = math.tanh %81 : vector<2x20xf32>
    %83 = arith.mulf %76, %82 : vector<2x20xf32>
    %84 = arith.truncf %83 : vector<2x20xf32> to vector<2x20xbf16>
    %cst_23 = arith.constant dense<0.000000e+00> : vector<2x80xf32>
    %85 = tpu.matmul %84, %1, %cst_23 {dimension_numbers = #tpu.dot_dimension_numbers<[1], [0], [0], [1], [0, 0, 1, 1], [], []>} : vector<2x20xbf16>, vector<20x80xbf16>, vector<2x80xf32> -> vector<2x80xf32>
    %86 = arith.truncf %62 : vector<2x20xf32> to vector<2x20xbf16>
    %cst_24 = arith.constant dense<0.000000e+00> : vector<2x80xf32>
    %87 = tpu.matmul %86, %2, %cst_24 {dimension_numbers = #tpu.dot_dimension_numbers<[1], [0], [0], [1], [0, 0, 1, 1], [], []>} : vector<2x20xbf16>, vector<20x80xbf16>, vector<2x80xf32> -> vector<2x80xf32>
    %88 = arith.addf %85, %87 : vector<2x80xf32>
    %89 = arith.addf %88, %5 : vector<2x80xf32>
    %90 = vector.extract_strided_slice %89 {offsets = [0, 0], sizes = [2, 60], strides = [1, 1]} : vector<2x80xf32> to vector<2x60xf32>
    %91 = arith.negf %90 : vector<2x60xf32>
    %92 = math.exp %91 : vector<2x60xf32>
    %cst_25 = arith.constant 1.000000e+00 : f32
    %93 = vector.broadcast %cst_25 : f32 to vector<2x60xf32>
    %94 = arith.addf %93, %92 : vector<2x60xf32>
    %95 = arith.divf %93, %94 : vector<2x60xf32>
    %96 = vector.extract_strided_slice %95 {offsets = [0, 0], sizes = [2, 20], strides = [1, 1]} : vector<2x60xf32> to vector<2x20xf32>
    %97 = vector.extract_strided_slice %95 {offsets = [0, 20], sizes = [2, 20], strides = [1, 1]} : vector<2x60xf32> to vector<2x20xf32>
    %98 = vector.extract_strided_slice %95 {offsets = [0, 40], sizes = [2, 20], strides = [1, 1]} : vector<2x60xf32> to vector<2x20xf32>
    %99 = vector.extract_strided_slice %89 {offsets = [0, 60], sizes = [2, 20], strides = [1, 1]} : vector<2x80xf32> to vector<2x20xf32>
    %100 = math.tanh %99 : vector<2x20xf32>
    %101 = arith.mulf %97, %60 : vector<2x20xf32>
    %102 = arith.mulf %96, %100 : vector<2x20xf32>
    %103 = arith.addf %101, %102 : vector<2x20xf32>
    %104 = math.tanh %103 : vector<2x20xf32>
    %105 = arith.mulf %98, %104 : vector<2x20xf32>
    %106 = vector.extract_strided_slice %18 {offsets = [0, 2, 0], sizes = [2, 1, 80], strides = [1, 1, 1]} : vector<2x8x80xf32> to vector<2x1x80xf32>
    %107 = vector.shape_cast %106 : vector<2x1x80xf32> to vector<2x80xf32>
    %108 = arith.truncf %83 : vector<2x20xf32> to vector<2x20xbf16>
    %cst_26 = arith.constant dense<0.000000e+00> : vector<2x80xf32>
    %109 = tpu.matmul %108, %0, %cst_26 {dimension_numbers = #tpu.dot_dimension_numbers<[1], [0], [0], [1], [0, 0, 1, 1], [], []>} : vector<2x20xbf16>, vector<20x80xbf16>, vector<2x80xf32> -> vector<2x80xf32>
    %110 = arith.addf %107, %109 : vector<2x80xf32>
    %111 = vector.extract_strided_slice %110 {offsets = [0, 0], sizes = [2, 60], strides = [1, 1]} : vector<2x80xf32> to vector<2x60xf32>
    %112 = arith.negf %111 : vector<2x60xf32>
    %113 = math.exp %112 : vector<2x60xf32>
    %cst_27 = arith.constant 1.000000e+00 : f32
    %114 = vector.broadcast %cst_27 : f32 to vector<2x60xf32>
    %115 = arith.addf %114, %113 : vector<2x60xf32>
    %116 = arith.divf %114, %115 : vector<2x60xf32>
    %117 = vector.extract_strided_slice %116 {offsets = [0, 0], sizes = [2, 20], strides = [1, 1]} : vector<2x60xf32> to vector<2x20xf32>
    %118 = vector.extract_strided_slice %116 {offsets = [0, 20], sizes = [2, 20], strides = [1, 1]} : vector<2x60xf32> to vector<2x20xf32>
    %119 = vector.extract_strided_slice %116 {offsets = [0, 40], sizes = [2, 20], strides = [1, 1]} : vector<2x60xf32> to vector<2x20xf32>
    %120 = vector.extract_strided_slice %110 {offsets = [0, 60], sizes = [2, 20], strides = [1, 1]} : vector<2x80xf32> to vector<2x20xf32>
    %121 = math.tanh %120 : vector<2x20xf32>
    %122 = arith.mulf %118, %81 : vector<2x20xf32>
    %123 = arith.mulf %117, %121 : vector<2x20xf32>
    %124 = arith.addf %122, %123 : vector<2x20xf32>
    %125 = math.tanh %124 : vector<2x20xf32>
    %126 = arith.mulf %119, %125 : vector<2x20xf32>
    %127 = arith.truncf %126 : vector<2x20xf32> to vector<2x20xbf16>
    %cst_28 = arith.constant dense<0.000000e+00> : vector<2x80xf32>
    %128 = tpu.matmul %127, %1, %cst_28 {dimension_numbers = #tpu.dot_dimension_numbers<[1], [0], [0], [1], [0, 0, 1, 1], [], []>} : vector<2x20xbf16>, vector<20x80xbf16>, vector<2x80xf32> -> vector<2x80xf32>
    %129 = arith.truncf %105 : vector<2x20xf32> to vector<2x20xbf16>
    %cst_29 = arith.constant dense<0.000000e+00> : vector<2x80xf32>
    %130 = tpu.matmul %129, %2, %cst_29 {dimension_numbers = #tpu.dot_dimension_numbers<[1], [0], [0], [1], [0, 0, 1, 1], [], []>} : vector<2x20xbf16>, vector<20x80xbf16>, vector<2x80xf32> -> vector<2x80xf32>
    %131 = arith.addf %128, %130 : vector<2x80xf32>
    %132 = arith.addf %131, %5 : vector<2x80xf32>
    %133 = vector.extract_strided_slice %132 {offsets = [0, 0], sizes = [2, 60], strides = [1, 1]} : vector<2x80xf32> to vector<2x60xf32>
    %134 = arith.negf %133 : vector<2x60xf32>
    %135 = math.exp %134 : vector<2x60xf32>
    %cst_30 = arith.constant 1.000000e+00 : f32
    %136 = vector.broadcast %cst_30 : f32 to vector<2x60xf32>
    %137 = arith.addf %136, %135 : vector<2x60xf32>
    %138 = arith.divf %136, %137 : vector<2x60xf32>
    %139 = vector.extract_strided_slice %138 {offsets = [0, 0], sizes = [2, 20], strides = [1, 1]} : vector<2x60xf32> to vector<2x20xf32>
    %140 = vector.extract_strided_slice %138 {offsets = [0, 20], sizes = [2, 20], strides = [1, 1]} : vector<2x60xf32> to vector<2x20xf32>
    %141 = vector.extract_strided_slice %138 {offsets = [0, 40], sizes = [2, 20], strides = [1, 1]} : vector<2x60xf32> to vector<2x20xf32>
    %142 = vector.extract_strided_slice %132 {offsets = [0, 60], sizes = [2, 20], strides = [1, 1]} : vector<2x80xf32> to vector<2x20xf32>
    %143 = math.tanh %142 : vector<2x20xf32>
    %144 = arith.mulf %140, %103 : vector<2x20xf32>
    %145 = arith.mulf %139, %143 : vector<2x20xf32>
    %146 = arith.addf %144, %145 : vector<2x20xf32>
    %147 = math.tanh %146 : vector<2x20xf32>
    %148 = arith.mulf %141, %147 : vector<2x20xf32>
    %149 = vector.extract_strided_slice %18 {offsets = [0, 3, 0], sizes = [2, 1, 80], strides = [1, 1, 1]} : vector<2x8x80xf32> to vector<2x1x80xf32>
    %150 = vector.shape_cast %149 : vector<2x1x80xf32> to vector<2x80xf32>
    %151 = arith.truncf %126 : vector<2x20xf32> to vector<2x20xbf16>
    %cst_31 = arith.constant dense<0.000000e+00> : vector<2x80xf32>
    %152 = tpu.matmul %151, %0, %cst_31 {dimension_numbers = #tpu.dot_dimension_numbers<[1], [0], [0], [1], [0, 0, 1, 1], [], []>} : vector<2x20xbf16>, vector<20x80xbf16>, vector<2x80xf32> -> vector<2x80xf32>
    %153 = arith.addf %150, %152 : vector<2x80xf32>
    %154 = vector.extract_strided_slice %153 {offsets = [0, 0], sizes = [2, 60], strides = [1, 1]} : vector<2x80xf32> to vector<2x60xf32>
    %155 = arith.negf %154 : vector<2x60xf32>
    %156 = math.exp %155 : vector<2x60xf32>
    %cst_32 = arith.constant 1.000000e+00 : f32
    %157 = vector.broadcast %cst_32 : f32 to vector<2x60xf32>
    %158 = arith.addf %157, %156 : vector<2x60xf32>
    %159 = arith.divf %157, %158 : vector<2x60xf32>
    %160 = vector.extract_strided_slice %159 {offsets = [0, 0], sizes = [2, 20], strides = [1, 1]} : vector<2x60xf32> to vector<2x20xf32>
    %161 = vector.extract_strided_slice %159 {offsets = [0, 20], sizes = [2, 20], strides = [1, 1]} : vector<2x60xf32> to vector<2x20xf32>
    %162 = vector.extract_strided_slice %159 {offsets = [0, 40], sizes = [2, 20], strides = [1, 1]} : vector<2x60xf32> to vector<2x20xf32>
    %163 = vector.extract_strided_slice %153 {offsets = [0, 60], sizes = [2, 20], strides = [1, 1]} : vector<2x80xf32> to vector<2x20xf32>
    %164 = math.tanh %163 : vector<2x20xf32>
    %165 = arith.mulf %161, %124 : vector<2x20xf32>
    %166 = arith.mulf %160, %164 : vector<2x20xf32>
    %167 = arith.addf %165, %166 : vector<2x20xf32>
    %168 = math.tanh %167 : vector<2x20xf32>
    %169 = arith.mulf %162, %168 : vector<2x20xf32>
    %170 = arith.truncf %169 : vector<2x20xf32> to vector<2x20xbf16>
    %cst_33 = arith.constant dense<0.000000e+00> : vector<2x80xf32>
    %171 = tpu.matmul %170, %1, %cst_33 {dimension_numbers = #tpu.dot_dimension_numbers<[1], [0], [0], [1], [0, 0, 1, 1], [], []>} : vector<2x20xbf16>, vector<20x80xbf16>, vector<2x80xf32> -> vector<2x80xf32>
    %172 = arith.truncf %148 : vector<2x20xf32> to vector<2x20xbf16>
    %cst_34 = arith.constant dense<0.000000e+00> : vector<2x80xf32>
    %173 = tpu.matmul %172, %2, %cst_34 {dimension_numbers = #tpu.dot_dimension_numbers<[1], [0], [0], [1], [0, 0, 1, 1], [], []>} : vector<2x20xbf16>, vector<20x80xbf16>, vector<2x80xf32> -> vector<2x80xf32>
    %174 = arith.addf %171, %173 : vector<2x80xf32>
    %175 = arith.addf %174, %5 : vector<2x80xf32>
    %176 = vector.extract_strided_slice %175 {offsets = [0, 0], sizes = [2, 60], strides = [1, 1]} : vector<2x80xf32> to vector<2x60xf32>
    %177 = arith.negf %176 : vector<2x60xf32>
    %178 = math.exp %177 : vector<2x60xf32>
    %cst_35 = arith.constant 1.000000e+00 : f32
    %179 = vector.broadcast %cst_35 : f32 to vector<2x60xf32>
    %180 = arith.addf %179, %178 : vector<2x60xf32>
    %181 = arith.divf %179, %180 : vector<2x60xf32>
    %182 = vector.extract_strided_slice %181 {offsets = [0, 0], sizes = [2, 20], strides = [1, 1]} : vector<2x60xf32> to vector<2x20xf32>
    %183 = vector.extract_strided_slice %181 {offsets = [0, 20], sizes = [2, 20], strides = [1, 1]} : vector<2x60xf32> to vector<2x20xf32>
    %184 = vector.extract_strided_slice %181 {offsets = [0, 40], sizes = [2, 20], strides = [1, 1]} : vector<2x60xf32> to vector<2x20xf32>
    %185 = vector.extract_strided_slice %175 {offsets = [0, 60], sizes = [2, 20], strides = [1, 1]} : vector<2x80xf32> to vector<2x20xf32>
    %186 = math.tanh %185 : vector<2x20xf32>
    %187 = arith.mulf %183, %146 : vector<2x20xf32>
    %188 = arith.mulf %182, %186 : vector<2x20xf32>
    %189 = arith.addf %187, %188 : vector<2x20xf32>
    %190 = math.tanh %189 : vector<2x20xf32>
    %191 = arith.mulf %184, %190 : vector<2x20xf32>
    %192 = vector.extract_strided_slice %18 {offsets = [0, 4, 0], sizes = [2, 1, 80], strides = [1, 1, 1]} : vector<2x8x80xf32> to vector<2x1x80xf32>
    %193 = vector.shape_cast %192 : vector<2x1x80xf32> to vector<2x80xf32>
    %194 = arith.truncf %169 : vector<2x20xf32> to vector<2x20xbf16>
    %cst_36 = arith.constant dense<0.000000e+00> : vector<2x80xf32>
    %195 = tpu.matmul %194, %0, %cst_36 {dimension_numbers = #tpu.dot_dimension_numbers<[1], [0], [0], [1], [0, 0, 1, 1], [], []>} : vector<2x20xbf16>, vector<20x80xbf16>, vector<2x80xf32> -> vector<2x80xf32>
    %196 = arith.addf %193, %195 : vector<2x80xf32>
    %197 = vector.extract_strided_slice %196 {offsets = [0, 0], sizes = [2, 60], strides = [1, 1]} : vector<2x80xf32> to vector<2x60xf32>
    %198 = arith.negf %197 : vector<2x60xf32>
    %199 = math.exp %198 : vector<2x60xf32>
    %cst_37 = arith.constant 1.000000e+00 : f32
    %200 = vector.broadcast %cst_37 : f32 to vector<2x60xf32>
    %201 = arith.addf %200, %199 : vector<2x60xf32>
    %202 = arith.divf %200, %201 : vector<2x60xf32>
    %203 = vector.extract_strided_slice %202 {offsets = [0, 0], sizes = [2, 20], strides = [1, 1]} : vector<2x60xf32> to vector<2x20xf32>
    %204 = vector.extract_strided_slice %202 {offsets = [0, 20], sizes = [2, 20], strides = [1, 1]} : vector<2x60xf32> to vector<2x20xf32>
    %205 = vector.extract_strided_slice %202 {offsets = [0, 40], sizes = [2, 20], strides = [1, 1]} : vector<2x60xf32> to vector<2x20xf32>
    %206 = vector.extract_strided_slice %196 {offsets = [0, 60], sizes = [2, 20], strides = [1, 1]} : vector<2x80xf32> to vector<2x20xf32>
    %207 = math.tanh %206 : vector<2x20xf32>
    %208 = arith.mulf %204, %167 : vector<2x20xf32>
    %209 = arith.mulf %203, %207 : vector<2x20xf32>
    %210 = arith.addf %208, %209 : vector<2x20xf32>
    %211 = math.tanh %210 : vector<2x20xf32>
    %212 = arith.mulf %205, %211 : vector<2x20xf32>
    %213 = arith.truncf %212 : vector<2x20xf32> to vector<2x20xbf16>
    %cst_38 = arith.constant dense<0.000000e+00> : vector<2x80xf32>
    %214 = tpu.matmul %213, %1, %cst_38 {dimension_numbers = #tpu.dot_dimension_numbers<[1], [0], [0], [1], [0, 0, 1, 1], [], []>} : vector<2x20xbf16>, vector<20x80xbf16>, vector<2x80xf32> -> vector<2x80xf32>
    %215 = arith.truncf %191 : vector<2x20xf32> to vector<2x20xbf16>
    %cst_39 = arith.constant dense<0.000000e+00> : vector<2x80xf32>
    %216 = tpu.matmul %215, %2, %cst_39 {dimension_numbers = #tpu.dot_dimension_numbers<[1], [0], [0], [1], [0, 0, 1, 1], [], []>} : vector<2x20xbf16>, vector<20x80xbf16>, vector<2x80xf32> -> vector<2x80xf32>
    %217 = arith.addf %214, %216 : vector<2x80xf32>
    %218 = arith.addf %217, %5 : vector<2x80xf32>
    %219 = vector.extract_strided_slice %218 {offsets = [0, 0], sizes = [2, 60], strides = [1, 1]} : vector<2x80xf32> to vector<2x60xf32>
    %220 = arith.negf %219 : vector<2x60xf32>
    %221 = math.exp %220 : vector<2x60xf32>
    %cst_40 = arith.constant 1.000000e+00 : f32
    %222 = vector.broadcast %cst_40 : f32 to vector<2x60xf32>
    %223 = arith.addf %222, %221 : vector<2x60xf32>
    %224 = arith.divf %222, %223 : vector<2x60xf32>
    %225 = vector.extract_strided_slice %224 {offsets = [0, 0], sizes = [2, 20], strides = [1, 1]} : vector<2x60xf32> to vector<2x20xf32>
    %226 = vector.extract_strided_slice %224 {offsets = [0, 20], sizes = [2, 20], strides = [1, 1]} : vector<2x60xf32> to vector<2x20xf32>
    %227 = vector.extract_strided_slice %224 {offsets = [0, 40], sizes = [2, 20], strides = [1, 1]} : vector<2x60xf32> to vector<2x20xf32>
    %228 = vector.extract_strided_slice %218 {offsets = [0, 60], sizes = [2, 20], strides = [1, 1]} : vector<2x80xf32> to vector<2x20xf32>
    %229 = math.tanh %228 : vector<2x20xf32>
    %230 = arith.mulf %226, %189 : vector<2x20xf32>
    %231 = arith.mulf %225, %229 : vector<2x20xf32>
    %232 = arith.addf %230, %231 : vector<2x20xf32>
    %233 = math.tanh %232 : vector<2x20xf32>
    %234 = arith.mulf %227, %233 : vector<2x20xf32>
    %235 = vector.extract_strided_slice %18 {offsets = [0, 5, 0], sizes = [2, 1, 80], strides = [1, 1, 1]} : vector<2x8x80xf32> to vector<2x1x80xf32>
    %236 = vector.shape_cast %235 : vector<2x1x80xf32> to vector<2x80xf32>
    %237 = arith.truncf %212 : vector<2x20xf32> to vector<2x20xbf16>
    %cst_41 = arith.constant dense<0.000000e+00> : vector<2x80xf32>
    %238 = tpu.matmul %237, %0, %cst_41 {dimension_numbers = #tpu.dot_dimension_numbers<[1], [0], [0], [1], [0, 0, 1, 1], [], []>} : vector<2x20xbf16>, vector<20x80xbf16>, vector<2x80xf32> -> vector<2x80xf32>
    %239 = arith.addf %236, %238 : vector<2x80xf32>
    %240 = vector.extract_strided_slice %239 {offsets = [0, 0], sizes = [2, 60], strides = [1, 1]} : vector<2x80xf32> to vector<2x60xf32>
    %241 = arith.negf %240 : vector<2x60xf32>
    %242 = math.exp %241 : vector<2x60xf32>
    %cst_42 = arith.constant 1.000000e+00 : f32
    %243 = vector.broadcast %cst_42 : f32 to vector<2x60xf32>
    %244 = arith.addf %243, %242 : vector<2x60xf32>
    %245 = arith.divf %243, %244 : vector<2x60xf32>
    %246 = vector.extract_strided_slice %245 {offsets = [0, 0], sizes = [2, 20], strides = [1, 1]} : vector<2x60xf32> to vector<2x20xf32>
    %247 = vector.extract_strided_slice %245 {offsets = [0, 20], sizes = [2, 20], strides = [1, 1]} : vector<2x60xf32> to vector<2x20xf32>
    %248 = vector.extract_strided_slice %245 {offsets = [0, 40], sizes = [2, 20], strides = [1, 1]} : vector<2x60xf32> to vector<2x20xf32>
    %249 = vector.extract_strided_slice %239 {offsets = [0, 60], sizes = [2, 20], strides = [1, 1]} : vector<2x80xf32> to vector<2x20xf32>
    %250 = math.tanh %249 : vector<2x20xf32>
    %251 = arith.mulf %247, %210 : vector<2x20xf32>
    %252 = arith.mulf %246, %250 : vector<2x20xf32>
    %253 = arith.addf %251, %252 : vector<2x20xf32>
    %254 = math.tanh %253 : vector<2x20xf32>
    %255 = arith.mulf %248, %254 : vector<2x20xf32>
    %256 = arith.truncf %255 : vector<2x20xf32> to vector<2x20xbf16>
    %cst_43 = arith.constant dense<0.000000e+00> : vector<2x80xf32>
    %257 = tpu.matmul %256, %1, %cst_43 {dimension_numbers = #tpu.dot_dimension_numbers<[1], [0], [0], [1], [0, 0, 1, 1], [], []>} : vector<2x20xbf16>, vector<20x80xbf16>, vector<2x80xf32> -> vector<2x80xf32>
    %258 = arith.truncf %234 : vector<2x20xf32> to vector<2x20xbf16>
    %cst_44 = arith.constant dense<0.000000e+00> : vector<2x80xf32>
    %259 = tpu.matmul %258, %2, %cst_44 {dimension_numbers = #tpu.dot_dimension_numbers<[1], [0], [0], [1], [0, 0, 1, 1], [], []>} : vector<2x20xbf16>, vector<20x80xbf16>, vector<2x80xf32> -> vector<2x80xf32>
    %260 = arith.addf %257, %259 : vector<2x80xf32>
    %261 = arith.addf %260, %5 : vector<2x80xf32>
    %262 = vector.extract_strided_slice %261 {offsets = [0, 0], sizes = [2, 60], strides = [1, 1]} : vector<2x80xf32> to vector<2x60xf32>
    %263 = arith.negf %262 : vector<2x60xf32>
    %264 = math.exp %263 : vector<2x60xf32>
    %cst_45 = arith.constant 1.000000e+00 : f32
    %265 = vector.broadcast %cst_45 : f32 to vector<2x60xf32>
    %266 = arith.addf %265, %264 : vector<2x60xf32>
    %267 = arith.divf %265, %266 : vector<2x60xf32>
    %268 = vector.extract_strided_slice %267 {offsets = [0, 0], sizes = [2, 20], strides = [1, 1]} : vector<2x60xf32> to vector<2x20xf32>
    %269 = vector.extract_strided_slice %267 {offsets = [0, 20], sizes = [2, 20], strides = [1, 1]} : vector<2x60xf32> to vector<2x20xf32>
    %270 = vector.extract_strided_slice %267 {offsets = [0, 40], sizes = [2, 20], strides = [1, 1]} : vector<2x60xf32> to vector<2x20xf32>
    %271 = vector.extract_strided_slice %261 {offsets = [0, 60], sizes = [2, 20], strides = [1, 1]} : vector<2x80xf32> to vector<2x20xf32>
    %272 = math.tanh %271 : vector<2x20xf32>
    %273 = arith.mulf %269, %232 : vector<2x20xf32>
    %274 = arith.mulf %268, %272 : vector<2x20xf32>
    %275 = arith.addf %273, %274 : vector<2x20xf32>
    %276 = math.tanh %275 : vector<2x20xf32>
    %277 = arith.mulf %270, %276 : vector<2x20xf32>
    %278 = vector.extract_strided_slice %18 {offsets = [0, 6, 0], sizes = [2, 1, 80], strides = [1, 1, 1]} : vector<2x8x80xf32> to vector<2x1x80xf32>
    %279 = vector.shape_cast %278 : vector<2x1x80xf32> to vector<2x80xf32>
    %280 = arith.truncf %255 : vector<2x20xf32> to vector<2x20xbf16>
    %cst_46 = arith.constant dense<0.000000e+00> : vector<2x80xf32>
    %281 = tpu.matmul %280, %0, %cst_46 {dimension_numbers = #tpu.dot_dimension_numbers<[1], [0], [0], [1], [0, 0, 1, 1], [], []>} : vector<2x20xbf16>, vector<20x80xbf16>, vector<2x80xf32> -> vector<2x80xf32>
    %282 = arith.addf %279, %281 : vector<2x80xf32>
    %283 = vector.extract_strided_slice %282 {offsets = [0, 0], sizes = [2, 60], strides = [1, 1]} : vector<2x80xf32> to vector<2x60xf32>
    %284 = arith.negf %283 : vector<2x60xf32>
    %285 = math.exp %284 : vector<2x60xf32>
    %cst_47 = arith.constant 1.000000e+00 : f32
    %286 = vector.broadcast %cst_47 : f32 to vector<2x60xf32>
    %287 = arith.addf %286, %285 : vector<2x60xf32>
    %288 = arith.divf %286, %287 : vector<2x60xf32>
    %289 = vector.extract_strided_slice %288 {offsets = [0, 0], sizes = [2, 20], strides = [1, 1]} : vector<2x60xf32> to vector<2x20xf32>
    %290 = vector.extract_strided_slice %288 {offsets = [0, 20], sizes = [2, 20], strides = [1, 1]} : vector<2x60xf32> to vector<2x20xf32>
    %291 = vector.extract_strided_slice %288 {offsets = [0, 40], sizes = [2, 20], strides = [1, 1]} : vector<2x60xf32> to vector<2x20xf32>
    %292 = vector.extract_strided_slice %282 {offsets = [0, 60], sizes = [2, 20], strides = [1, 1]} : vector<2x80xf32> to vector<2x20xf32>
    %293 = math.tanh %292 : vector<2x20xf32>
    %294 = arith.mulf %290, %253 : vector<2x20xf32>
    %295 = arith.mulf %289, %293 : vector<2x20xf32>
    %296 = arith.addf %294, %295 : vector<2x20xf32>
    %297 = math.tanh %296 : vector<2x20xf32>
    %298 = arith.mulf %291, %297 : vector<2x20xf32>
    %299 = arith.truncf %298 : vector<2x20xf32> to vector<2x20xbf16>
    %cst_48 = arith.constant dense<0.000000e+00> : vector<2x80xf32>
    %300 = tpu.matmul %299, %1, %cst_48 {dimension_numbers = #tpu.dot_dimension_numbers<[1], [0], [0], [1], [0, 0, 1, 1], [], []>} : vector<2x20xbf16>, vector<20x80xbf16>, vector<2x80xf32> -> vector<2x80xf32>
    %301 = arith.truncf %277 : vector<2x20xf32> to vector<2x20xbf16>
    %cst_49 = arith.constant dense<0.000000e+00> : vector<2x80xf32>
    %302 = tpu.matmul %301, %2, %cst_49 {dimension_numbers = #tpu.dot_dimension_numbers<[1], [0], [0], [1], [0, 0, 1, 1], [], []>} : vector<2x20xbf16>, vector<20x80xbf16>, vector<2x80xf32> -> vector<2x80xf32>
    %303 = arith.addf %300, %302 : vector<2x80xf32>
    %304 = arith.addf %303, %5 : vector<2x80xf32>
    %305 = vector.extract_strided_slice %304 {offsets = [0, 0], sizes = [2, 60], strides = [1, 1]} : vector<2x80xf32> to vector<2x60xf32>
    %306 = arith.negf %305 : vector<2x60xf32>
    %307 = math.exp %306 : vector<2x60xf32>
    %cst_50 = arith.constant 1.000000e+00 : f32
    %308 = vector.broadcast %cst_50 : f32 to vector<2x60xf32>
    %309 = arith.addf %308, %307 : vector<2x60xf32>
    %310 = arith.divf %308, %309 : vector<2x60xf32>
    %311 = vector.extract_strided_slice %310 {offsets = [0, 0], sizes = [2, 20], strides = [1, 1]} : vector<2x60xf32> to vector<2x20xf32>
    %312 = vector.extract_strided_slice %310 {offsets = [0, 20], sizes = [2, 20], strides = [1, 1]} : vector<2x60xf32> to vector<2x20xf32>
    %313 = vector.extract_strided_slice %310 {offsets = [0, 40], sizes = [2, 20], strides = [1, 1]} : vector<2x60xf32> to vector<2x20xf32>
    %314 = vector.extract_strided_slice %304 {offsets = [0, 60], sizes = [2, 20], strides = [1, 1]} : vector<2x80xf32> to vector<2x20xf32>
    %315 = math.tanh %314 : vector<2x20xf32>
    %316 = arith.mulf %312, %275 : vector<2x20xf32>
    %317 = arith.mulf %311, %315 : vector<2x20xf32>
    %318 = arith.addf %316, %317 : vector<2x20xf32>
    %319 = math.tanh %318 : vector<2x20xf32>
    %320 = arith.mulf %313, %319 : vector<2x20xf32>
    %321 = vector.extract_strided_slice %18 {offsets = [0, 7, 0], sizes = [2, 1, 80], strides = [1, 1, 1]} : vector<2x8x80xf32> to vector<2x1x80xf32>
    %322 = vector.shape_cast %321 : vector<2x1x80xf32> to vector<2x80xf32>
    %323 = arith.truncf %298 : vector<2x20xf32> to vector<2x20xbf16>
    %cst_51 = arith.constant dense<0.000000e+00> : vector<2x80xf32>
    %324 = tpu.matmul %323, %0, %cst_51 {dimension_numbers = #tpu.dot_dimension_numbers<[1], [0], [0], [1], [0, 0, 1, 1], [], []>} : vector<2x20xbf16>, vector<20x80xbf16>, vector<2x80xf32> -> vector<2x80xf32>
    %325 = arith.addf %322, %324 : vector<2x80xf32>
    %326 = vector.extract_strided_slice %325 {offsets = [0, 0], sizes = [2, 60], strides = [1, 1]} : vector<2x80xf32> to vector<2x60xf32>
    %327 = arith.negf %326 : vector<2x60xf32>
    %328 = math.exp %327 : vector<2x60xf32>
    %cst_52 = arith.constant 1.000000e+00 : f32
    %329 = vector.broadcast %cst_52 : f32 to vector<2x60xf32>
    %330 = arith.addf %329, %328 : vector<2x60xf32>
    %331 = arith.divf %329, %330 : vector<2x60xf32>
    %332 = vector.extract_strided_slice %331 {offsets = [0, 0], sizes = [2, 20], strides = [1, 1]} : vector<2x60xf32> to vector<2x20xf32>
    %333 = vector.extract_strided_slice %331 {offsets = [0, 20], sizes = [2, 20], strides = [1, 1]} : vector<2x60xf32> to vector<2x20xf32>
    %334 = vector.extract_strided_slice %331 {offsets = [0, 40], sizes = [2, 20], strides = [1, 1]} : vector<2x60xf32> to vector<2x20xf32>
    %335 = vector.extract_strided_slice %325 {offsets = [0, 60], sizes = [2, 20], strides = [1, 1]} : vector<2x80xf32> to vector<2x20xf32>
    %336 = math.tanh %335 : vector<2x20xf32>
    %337 = arith.mulf %333, %296 : vector<2x20xf32>
    %338 = arith.mulf %332, %336 : vector<2x20xf32>
    %339 = arith.addf %337, %338 : vector<2x20xf32>
    %340 = math.tanh %339 : vector<2x20xf32>
    %341 = arith.mulf %334, %340 : vector<2x20xf32>
    %342 = arith.truncf %341 : vector<2x20xf32> to vector<2x20xbf16>
    %cst_53 = arith.constant dense<0.000000e+00> : vector<2x80xf32>
    %343 = tpu.matmul %342, %1, %cst_53 {dimension_numbers = #tpu.dot_dimension_numbers<[1], [0], [0], [1], [0, 0, 1, 1], [], []>} : vector<2x20xbf16>, vector<20x80xbf16>, vector<2x80xf32> -> vector<2x80xf32>
    %344 = arith.truncf %320 : vector<2x20xf32> to vector<2x20xbf16>
    %cst_54 = arith.constant dense<0.000000e+00> : vector<2x80xf32>
    %345 = tpu.matmul %344, %2, %cst_54 {dimension_numbers = #tpu.dot_dimension_numbers<[1], [0], [0], [1], [0, 0, 1, 1], [], []>} : vector<2x20xbf16>, vector<20x80xbf16>, vector<2x80xf32> -> vector<2x80xf32>
    %346 = arith.addf %343, %345 : vector<2x80xf32>
    %347 = arith.addf %346, %5 : vector<2x80xf32>
    %348 = vector.extract_strided_slice %347 {offsets = [0, 0], sizes = [2, 60], strides = [1, 1]} : vector<2x80xf32> to vector<2x60xf32>
    %349 = arith.negf %348 : vector<2x60xf32>
    %350 = math.exp %349 : vector<2x60xf32>
    %cst_55 = arith.constant 1.000000e+00 : f32
    %351 = vector.broadcast %cst_55 : f32 to vector<2x60xf32>
    %352 = arith.addf %351, %350 : vector<2x60xf32>
    %353 = arith.divf %351, %352 : vector<2x60xf32>
    %354 = vector.extract_strided_slice %353 {offsets = [0, 0], sizes = [2, 20], strides = [1, 1]} : vector<2x60xf32> to vector<2x20xf32>
    %355 = vector.extract_strided_slice %353 {offsets = [0, 20], sizes = [2, 20], strides = [1, 1]} : vector<2x60xf32> to vector<2x20xf32>
    %356 = vector.extract_strided_slice %353 {offsets = [0, 40], sizes = [2, 20], strides = [1, 1]} : vector<2x60xf32> to vector<2x20xf32>
    %357 = vector.extract_strided_slice %347 {offsets = [0, 60], sizes = [2, 20], strides = [1, 1]} : vector<2x80xf32> to vector<2x20xf32>
    %358 = math.tanh %357 : vector<2x20xf32>
    %359 = arith.mulf %355, %318 : vector<2x20xf32>
    %360 = arith.mulf %354, %358 : vector<2x20xf32>
    %361 = arith.addf %359, %360 : vector<2x20xf32>
    %362 = math.tanh %361 : vector<2x20xf32>
    %363 = arith.mulf %356, %362 : vector<2x20xf32>
    %364 = arith.truncf %363 : vector<2x20xf32> to vector<2x20xbf16>
    %c0_56 = arith.constant 0 : index
    %c0_57 = arith.constant 0 : index
    %365 = vector.load %arg7[%c0_56, %c0_57] : memref<20x15xbf16, #tpu.memory_space<vmem>>, vector<20x15xbf16>
    %cst_58 = arith.constant dense<0.000000e+00> : vector<2x15xf32>
    %366 = tpu.matmul %364, %365, %cst_58 {dimension_numbers = #tpu.dot_dimension_numbers<[1], [0], [0], [1], [0, 0, 1, 1], [], []>} : vector<2x20xbf16>, vector<20x15xbf16>, vector<2x15xf32> -> vector<2x15xf32>
    %367 = arith.addf %366, %8 : vector<2x15xf32>
    %c0_59 = arith.constant 0 : index
    %c0_60 = arith.constant 0 : index
    %368 = vector.load %arg9[%c0_59, %c0_60] : memref<2x15xf32, #tpu.memory_space<vmem>>, vector<2x15xf32>
    tpu.vector_store %arg9[%c0_59, %c0_60], %367 {strides = array<i32>} : memref<2x15xf32, #tpu.memory_space<vmem>>, vector<2x15xf32>,
    return
  }
}

</mosaic_0001>

<llo_original>
// kernel: lstm_forward.1
$region0: #{lstm_forward.1}
  #allocation0 [shape = 'u32[]', space=smem, size = 0x4, offset = 0x4, fixed_abs, tag = 'smem constant byte address 0x4 - core index']
  #allocation1 [shape = 'u32[144,128]{1,0:T(1,128)}', space=vmem, size = 0x12000, scoped, tag = 'internal scratch']
  %s0 = inlined_call_operand.vmem [shape: f32[2,8,1], index: 0, kind: input, shape index: {}]
  %s1 = inlined_call_operand.vmem [shape: f32[1,80], index: 1, kind: input, shape index: {}]
  %s2 = inlined_call_operand.vmem [shape: f32[1,80], index: 2, kind: input, shape index: {}]
  %s3 = inlined_call_operand.vmem [shape: bf16[20,80], index: 3, kind: input, shape index: {}]
  %s4 = inlined_call_operand.vmem [shape: bf16[20,80], index: 4, kind: input, shape index: {}]
  %s5 = inlined_call_operand.vmem [shape: bf16[20,80], index: 5, kind: input, shape index: {}]
  %s6 = inlined_call_operand.vmem [shape: f32[1,80], index: 6, kind: input, shape index: {}]
  %s7 = inlined_call_operand.vmem [shape: bf16[20,15], index: 7, kind: input, shape index: {}]
  %s8 = inlined_call_operand.vmem [shape: f32[1,15], index: 8, kind: input, shape index: {}]
  %s9 = inlined_call_operand.hbm [shape: f32[2,15], index: 9, kind: output, shape index: {}]
  %s10 = sld [smem:[#allocation0]]
  $region46: #{lstm_forward.1} parent=0
    _
  %s12 = ssub.s32 1, %s10
  %s13 = scalar_select 0, %s12, %s10
  $region1: #{lstm_forward.1} parent=0
    #allocation2 [shape = 'u8[1024]{0}', space=vmem, size = 0x400, scoped, tag = 'output window, operand 0, single buffered']
    #allocation3 [shape = 's32[1]{0}', space=sflag, size = 0x4, scoped, tag = 'scoped memory for lstm_forward.1']
    %14 = vsyncpa [#allocation3], 0
    // Predicated region
    $region2: #{lstm_forward.1} parent=1 // pred_check
      _
    $region3: #{lstm_forward.1} parent=1 // pred_check_branch
      %16 = sbr.rel (0) target = $region5
    $region4: #{lstm_forward.1} parent=1 // pred_region
      _
    $region5: #{lstm_forward.1} parent=1 // pred_fallthru
      _
    // Predicated region
    $region6: #{lstm_forward.1} parent=1 // pred_check
      _
    $region7: #{lstm_forward.1} parent=1 // pred_check_branch
      %18 = sbr.rel (0) target = $region9
    $region8: #{lstm_forward.1} parent=1 // pred_region
      _
    $region9: #{lstm_forward.1} parent=1 // pred_fallthru
      _
    // Predicated region
    $region10: #{lstm_forward.1} parent=1 // pred_check
      _
    $region11: #{lstm_forward.1} parent=1 // pred_check_branch
      %20 = sbr.rel (0) target = $region13
    $region12: #{lstm_forward.1} parent=1 // pred_region
      _
    $region13: #{lstm_forward.1} parent=1 // pred_fallthru
      _
    // Predicated region
    $region14: #{lstm_forward.1} parent=1 // pred_check
      _
    $region15: #{lstm_forward.1} parent=1 // pred_check_branch
      %22 = sbr.rel (0) target = $region17
    $region16: #{lstm_forward.1} parent=1 // pred_region
      _
    $region17: #{lstm_forward.1} parent=1 // pred_fallthru
      _
    // Predicated region
    $region18: #{lstm_forward.1} parent=1 // pred_check
      _
    $region19: #{lstm_forward.1} parent=1 // pred_check_branch
      %24 = sbr.rel (0) target = $region21
    $region20: #{lstm_forward.1} parent=1 // pred_region
      _
    $region21: #{lstm_forward.1} parent=1 // pred_fallthru
      _
    // Predicated region
    $region22: #{lstm_forward.1} parent=1 // pred_check
      _
    $region23: #{lstm_forward.1} parent=1 // pred_check_branch
      %26 = sbr.rel (0) target = $region25
    $region24: #{lstm_forward.1} parent=1 // pred_region
      _
    $region25: #{lstm_forward.1} parent=1 // pred_fallthru
      _
    // Predicated region
    $region26: #{lstm_forward.1} parent=1 // pred_check
      _
    $region27: #{lstm_forward.1} parent=1 // pred_check_branch
      %28 = sbr.rel (0) target = $region29
    $region28: #{lstm_forward.1} parent=1 // pred_region
      _
    $region29: #{lstm_forward.1} parent=1 // pred_fallthru
      _
    // Predicated region
    $region30: #{lstm_forward.1} parent=1 // pred_check
      _
    $region31: #{lstm_forward.1} parent=1 // pred_check_branch
      %30 = sbr.rel (0) target = $region33
    $region32: #{lstm_forward.1} parent=1 // pred_region
      _
    $region33: #{lstm_forward.1} parent=1 // pred_fallthru
      _
    // Predicated region
    $region34: #{lstm_forward.1} parent=1 // pred_check
      _
    $region35: #{lstm_forward.1} parent=1 // pred_check_branch
      %32 = sbr.rel (0) target = $region37
    $region36: #{lstm_forward.1} parent=1 // pred_region
      _
    $region37: #{lstm_forward.1} parent=1 // pred_fallthru
      _
    %v34 = vld [vmem:[%s3] sm:$0xf]
    %v35 = vld [vmem:[%s3 + $0x4] sm:$0xf]
    %v36 = vld [vmem:[%s3 + $0x8] sm:$0x3]
    %v37 = vld [vmem:[%s4] sm:$0xf]
    %v38 = vld [vmem:[%s4 + $0x4] sm:$0xf]
    %v39 = vld [vmem:[%s4 + $0x8] sm:$0x3]
    %v40 = vld [vmem:[%s5] sm:$0xf]
    %v41 = vld [vmem:[%s5 + $0x4] sm:$0xf]
    %v42 = vld [vmem:[%s5 + $0x8] sm:$0x3]
    %v43 = vld [vmem:[%s6] sm:$0x1]
    %v45 = vlaneseq
    %v46 = vshrl.u32 %v45, 7
    %v47 = vsub.s32 0, %v46
    %v48 = vrot.slane %v43, %v47
    %v50 = vld [vmem:[%s8] sm:$0x1]
    %v52 = vlaneseq
    %v53 = vshrl.u32 %v52, 7
    %v54 = vsub.s32 0, %v53
    %v55 = vrot.slane %v50, %v54
    %v57 = vld [vmem:[%s0] sm:$0xff]
    %v58 = vld [vmem:[%s0 + $0x8] sm:$0xff]
    %v59 = vld [vmem:[%s1] sm:$0x1]
    %61 = vset.pattern.permute.xlu0 0
    %62 = vperm.xlu0 %61, %v57
    %v63 = vpop.permute.xlu0 %62
    %66 = vset.pattern.permute.xlu0 0
    %67 = vperm.xlu0 %66, %v58
    %v68 = vpop.permute.xlu0 %67
    %v71 = vlaneseq
    %v72 = vshrl.u32 %v71, 7
    %v73 = vsub.s32 0, %v72
    %v74 = vrot.slane %v59, %v73
    %v76 = vmul.f32 %v63, %v74
    %v77 = vmul.f32 %v68, %v74
    %v78 = vld [vmem:[%s2] sm:$0x1]
    %v80 = vlaneseq
    %v81 = vshrl.u32 %v80, 7
    %v82 = vsub.s32 0, %v81
    %v83 = vrot.slane %v78, %v82
    %v85 = vadd.f32 %v76, %v83
    %v86 = vadd.f32 %v77, %v83
    %v90 = vunpack.c.l.b16 %v34
    %v91 = vunpack.c.l.b16 %v35
    %v92 = vunpack.c.l.b16 %v36
    %v93 = vpack.c.b16 %v91, %v90
    %v94 = vpack.c.b16 %v92, %v92
    %vm96 = vcmask 162816
    %v98 = vsel %vm96, 0, 0
    %vm100 = vcmask 1041408
    %v102 = vsel %vm100, %v94, 0
    %104 = vmatprep.subr.bf16.mxu0 0
    %105 = vmatpush1.bf16.msra.mxu0 0
    %106 = vmatprep.subr.bf16.mxu0 0
    %107 = vmatpush1.bf16.msra.mxu0 0
    %108 = vmatprep.subr.bf16.mxu0 0
    %109 = vmatpush1.bf16.msra.mxu0 0
    %110 = vmatprep.subr.bf16.mxu0 0
    %111 = vmatpush1.bf16.msra.mxu0 0
    %112 = vmatprep.subr.bf16.mxu0 0
    %113 = vmatpush1.bf16.msra.mxu0 0
    %114 = vmatprep.subr.bf16.mxu0 0
    %115 = vmatpush1.bf16.msra.mxu0 0
    %116 = vmatprep.subr.bf16.mxu0 0
    %117 = vmatpush1.bf16.msra.mxu0 %v102
    %118 = vmatprep.subr.bf16.mxu0 0
    %119 = vmatpush1.bf16.msra.mxu0 %v93
    %120 = vmatprep.subr.bf16.mxu0 0
    %121 = vmatpush2.bf16.msra.mxu0 0
    %122 = vmatprep.subr.bf16.mxu0 0
    %123 = vmatpush2.bf16.msra.mxu0 0
    %124 = vmatprep.subr.bf16.mxu0 0
    %125 = vmatpush2.bf16.msra.mxu0 0
    %126 = vmatprep.subr.bf16.mxu0 0
    %127 = vmatpush2.bf16.msra.mxu0 0
    %128 = vmatprep.subr.bf16.mxu0 0
    %129 = vmatpush2.bf16.msra.mxu0 0
    %130 = vmatprep.subr.bf16.mxu0 0
    %131 = vmatpush2.bf16.msra.mxu0 0
    %132 = vmatprep.subr.bf16.mxu0 0
    %133 = vmatpush2.bf16.msra.mxu0 0
    %134 = vmatprep.subr.bf16.mxu0 0
    %135 = vmatpush2.bf16.msra.mxu0 0
    %136 = vmatprep.mubr.bf16.mxu0 0
    %137 = vmatmul.mubr.bf16.gmra.mxu0 %v98
    %v138 = vpop.f32.mrf.mxu0
    %v139 = vadd.f32 0.0, %v138
    %v140 = vpop.f32.mrf.mxu0
    %v141 = vpop.f32.mrf.mxu0
    %v142 = vpop.f32.mrf.mxu0
    %143 = vdwg.mxu0
    %v145 = vrot.slane %v139, 1
    %v148 = vadd.f32 %v85, %v139
    %v149 = vadd.f32 %v86, %v145
    %v150 = vxor.u32 %v148, 2147483648
    %v151 = vxor.u32 %v149, 2147483648
    %v152 = vmul.f32 %v150, 1.442695
    %v153 = vpow.pop %v152
    %v154 = vmul.f32 %v151, 1.442695
    %v155 = vpow.pop %v154
    %v156 = vadd.f32 %v153, 1.0
    %v157 = vadd.f32 %v155, 1.0
    %v158 = vrcp.pop %v156
    %v159 = vmul.f32 1.0, %v158
    %v160 = vrcp.pop %v157
    %v161 = vmul.f32 1.0, %v160
    %v162 = vtanh.pop %v148
    %v163 = vtanh.pop %v149
    %v164 = vmul.f32 %v159, 0.0
    %v165 = vmul.f32 %v161, 0.0
    %168 = vrot.lane.b32.xlu0 %v162, 68
    %v169 = vpop.permute.xlu0 %168
    %170 = vrot.lane.b32.xlu0 %v163, 68
    %v171 = vpop.permute.xlu0 %170
    %v174 = vmul.f32 %v159, %v169
    %v175 = vmul.f32 %v161, %v171
    %178 = vrot.lane.b32.xlu0 %v174, 20
    %v179 = vpop.permute.xlu0 %178
    %180 = vrot.lane.b32.xlu0 %v175, 20
    %v181 = vpop.permute.xlu0 %180
    %v184 = vadd.f32 %v164, %v179
    %v185 = vadd.f32 %v165, %v181
    %v186 = vtanh.pop %v184
    %v187 = vtanh.pop %v185
    %190 = vrot.lane.b32.xlu0 %v186, 20
    %v191 = vpop.permute.xlu0 %190
    %192 = vrot.lane.b32.xlu0 %v187, 20
    %v193 = vpop.permute.xlu0 %192
    %v196 = vmul.f32 %v159, %v191
    %v197 = vmul.f32 %v161, %v193
    %v198 = vpack.c.bf16 %v196, %v196
    %v199 = vpack.c.bf16 %v197, %v197
    %v203 = vunpack.c.l.b16 %v40
    %v204 = vunpack.c.l.b16 %v41
    %v205 = vunpack.c.l.b16 %v42
    %v206 = vpack.c.b16 %v204, %v203
    %v207 = vpack.c.b16 %v205, %v205
    %v210 = vsel %vm100, %v207, 0
    %212 = vmatprep.subr.bf16.mxu0 0
    %213 = vmatpush1.bf16.msra.mxu0 0
    %214 = vmatprep.subr.bf16.mxu0 0
    %215 = vmatpush1.bf16.msra.mxu0 0
    %216 = vmatprep.subr.bf16.mxu0 0
    %217 = vmatpush1.bf16.msra.mxu0 0
    %218 = vmatprep.subr.bf16.mxu0 0
    %219 = vmatpush1.bf16.msra.mxu0 0
    %220 = vmatprep.subr.bf16.mxu0 0
    %221 = vmatpush1.bf16.msra.mxu0 0
    %222 = vmatprep.subr.bf16.mxu0 0
    %223 = vmatpush1.bf16.msra.mxu0 0
    %224 = vmatprep.subr.bf16.mxu0 0
    %225 = vmatpush1.bf16.msra.mxu0 %v210
    %226 = vmatprep.subr.bf16.mxu0 0
    %227 = vmatpush1.bf16.msra.mxu0 %v206
    %228 = vmatprep.subr.bf16.mxu0 0
    %229 = vmatpush2.bf16.msra.mxu0 0
    %230 = vmatprep.subr.bf16.mxu0 0
    %231 = vmatpush2.bf16.msra.mxu0 0
    %232 = vmatprep.subr.bf16.mxu0 0
    %233 = vmatpush2.bf16.msra.mxu0 0
    %234 = vmatprep.subr.bf16.mxu0 0
    %235 = vmatpush2.bf16.msra.mxu0 0
    %236 = vmatprep.subr.bf16.mxu0 0
    %237 = vmatpush2.bf16.msra.mxu0 0
    %238 = vmatprep.subr.bf16.mxu0 0
    %239 = vmatpush2.bf16.msra.mxu0 0
    %240 = vmatprep.subr.bf16.mxu0 0
    %241 = vmatpush2.bf16.msra.mxu0 0
    %242 = vmatprep.subr.bf16.mxu0 0
    %243 = vmatpush2.bf16.msra.mxu0 0
    %244 = vmatprep.mubr.bf16.mxu0 0
    %245 = vmatmul.mubr.bf16.gmra.mxu0 %v98
    %v246 = vpop.f32.mrf.mxu0
    %v247 = vadd.f32 0.0, %v246
    %v248 = vpop.f32.mrf.mxu0
    %v249 = vpop.f32.mrf.mxu0
    %v250 = vpop.f32.mrf.mxu0
    %251 = vdwg.mxu0
    %v254 = vunpack.c.l.b16 %v198
    %v255 = vunpack.c.l.b16 %v199
    %v256 = vrot.slane %v255, 7
    %vm257 = vcmask 1041409
    %v258 = vsel %vm257, %v256, %v254
    %v259 = vpack.c.b16 %v258, %v258
    %260 = vrot.lane.b32.xlu0 %v259, 88
    %v261 = vpop.permute.xlu0 %260
    %v265 = vunpack.c.l.b16 %v37
    %v266 = vunpack.c.l.b16 %v38
    %v267 = vunpack.c.l.b16 %v39
    %v268 = vpack.c.b16 %v266, %v265
    %v269 = vpack.c.b16 %v267, %v267
    %v272 = vsel %vm96, %v261, 0
    %v275 = vsel %vm100, %v269, 0
    %277 = vmatprep.subr.bf16.mxu0 0
    %278 = vmatpush1.bf16.msra.mxu0 0
    %279 = vmatprep.subr.bf16.mxu0 0
    %280 = vmatpush1.bf16.msra.mxu0 0
    %281 = vmatprep.subr.bf16.mxu0 0
    %282 = vmatpush1.bf16.msra.mxu0 0
    %283 = vmatprep.subr.bf16.mxu0 0
    %284 = vmatpush1.bf16.msra.mxu0 0
    %285 = vmatprep.subr.bf16.mxu0 0
    %286 = vmatpush1.bf16.msra.mxu0 0
    %287 = vmatprep.subr.bf16.mxu0 0
    %288 = vmatpush1.bf16.msra.mxu0 0
    %289 = vmatprep.subr.bf16.mxu0 0
    %290 = vmatpush1.bf16.msra.mxu0 %v275
    %291 = vmatprep.subr.bf16.mxu0 0
    %292 = vmatpush1.bf16.msra.mxu0 %v268
    %293 = vmatprep.subr.bf16.mxu0 0
    %294 = vmatpush2.bf16.msra.mxu0 0
    %295 = vmatprep.subr.bf16.mxu0 0
    %296 = vmatpush2.bf16.msra.mxu0 0
    %297 = vmatprep.subr.bf16.mxu0 0
    %298 = vmatpush2.bf16.msra.mxu0 0
    %299 = vmatprep.subr.bf16.mxu0 0
    %300 = vmatpush2.bf16.msra.mxu0 0
    %301 = vmatprep.subr.bf16.mxu0 0
    %302 = vmatpush2.bf16.msra.mxu0 0
    %303 = vmatprep.subr.bf16.mxu0 0
    %304 = vmatpush2.bf16.msra.mxu0 0
    %305 = vmatprep.subr.bf16.mxu0 0
    %306 = vmatpush2.bf16.msra.mxu0 0
    %307 = vmatprep.subr.bf16.mxu0 0
    %308 = vmatpush2.bf16.msra.mxu0 0
    %309 = vmatprep.mubr.bf16.mxu0 0
    %310 = vmatmul.mubr.bf16.gmra.mxu0 %v272
    %v311 = vpop.f32.mrf.mxu0
    %v312 = vadd.f32 %v247, %v311
    %v313 = vpop.f32.mrf.mxu0
    %v314 = vpop.f32.mrf.mxu0
    %v315 = vpop.f32.mrf.mxu0
    %316 = vdwg.mxu0
    %v317 = vadd.f32 %v312, %v48
    %v318 = vxor.u32 %v317, 2147483648
    %v319 = vmul.f32 %v318, 1.442695
    %v320 = vpow.pop %v319
    %v321 = vadd.f32 %v320, 1.0
    %v322 = vrcp.pop %v321
    %v323 = vmul.f32 1.0, %v322
    %v324 = vtanh.pop %v317
    %v325 = vmul.f32 %v323, 0.0
    %327 = vrot.lane.b32.xlu0 %v324, 68
    %v328 = vpop.permute.xlu0 %327
    %v330 = vmul.f32 %v323, %v328
    %332 = vrot.lane.b32.xlu0 %v330, 20
    %v333 = vpop.permute.xlu0 %332
    %v335 = vadd.f32 %v325, %v333
    %v336 = vtanh.pop %v335
    %338 = vrot.lane.b32.xlu0 %v336, 20
    %v339 = vpop.permute.xlu0 %338
    %v341 = vmul.f32 %v323, %v339
    %342 = vmatprep.subr.bf16.mxu0 0
    %343 = vmatpush1.bf16.msra.mxu0 0
    %344 = vmatprep.subr.bf16.mxu0 0
    %345 = vmatpush1.bf16.msra.mxu0 0
    %346 = vmatprep.subr.bf16.mxu0 0
    %347 = vmatpush1.bf16.msra.mxu0 0
    %348 = vmatprep.subr.bf16.mxu0 0
    %349 = vmatpush1.bf16.msra.mxu0 0
    %350 = vmatprep.subr.bf16.mxu0 0
    %351 = vmatpush1.bf16.msra.mxu0 0
    %352 = vmatprep.subr.bf16.mxu0 0
    %353 = vmatpush1.bf16.msra.mxu0 0
    %354 = vmatprep.subr.bf16.mxu0 0
    %355 = vmatpush1.bf16.msra.mxu0 %v102
    %356 = vmatprep.subr.bf16.mxu0 0
    %357 = vmatpush1.bf16.msra.mxu0 %v93
    %358 = vmatprep.subr.bf16.mxu0 0
    %359 = vmatpush2.bf16.msra.mxu0 0
    %360 = vmatprep.subr.bf16.mxu0 0
    %361 = vmatpush2.bf16.msra.mxu0 0
    %362 = vmatprep.subr.bf16.mxu0 0
    %363 = vmatpush2.bf16.msra.mxu0 0
    %364 = vmatprep.subr.bf16.mxu0 0
    %365 = vmatpush2.bf16.msra.mxu0 0
    %366 = vmatprep.subr.bf16.mxu0 0
    %367 = vmatpush2.bf16.msra.mxu0 0
    %368 = vmatprep.subr.bf16.mxu0 0
    %369 = vmatpush2.bf16.msra.mxu0 0
    %370 = vmatprep.subr.bf16.mxu0 0
    %371 = vmatpush2.bf16.msra.mxu0 0
    %372 = vmatprep.subr.bf16.mxu0 0
    %373 = vmatpush2.bf16.msra.mxu0 0
    %374 = vmatprep.mubr.bf16.mxu0 0
    %375 = vmatmul.mubr.bf16.gmra.mxu0 %v272
    %v376 = vpop.f32.mrf.mxu0
    %v377 = vadd.f32 0.0, %v376
    %v378 = vpop.f32.mrf.mxu0
    %v379 = vpop.f32.mrf.mxu0
    %v380 = vpop.f32.mrf.mxu0
    %381 = vdwg.mxu0
    %v383 = vrot.slane %v377, 7
    %v386 = vadd.f32 %v85, %v383
    %v387 = vadd.f32 %v86, %v377
    %v388 = vxor.u32 %v386, 2147483648
    %v389 = vxor.u32 %v387, 2147483648
    %v390 = vmul.f32 %v388, 1.442695
    %v391 = vpow.pop %v390
    %v392 = vmul.f32 %v389, 1.442695
    %v393 = vpow.pop %v392
    %v394 = vadd.f32 %v391, 1.0
    %v395 = vadd.f32 %v393, 1.0
    %v396 = vrcp.pop %v394
    %v397 = vmul.f32 1.0, %v396
    %v398 = vrcp.pop %v395
    %v399 = vmul.f32 1.0, %v398
    %v400 = vtanh.pop %v386
    %v401 = vtanh.pop %v387
    %v404 = vrot.slane %v184, 7
    %v405 = vrot.slane %v185, 7
    %v408 = vmul.f32 %v397, %v404
    %v409 = vmul.f32 %v399, %v405
    %412 = vrot.lane.b32.xlu0 %v400, 68
    %v413 = vpop.permute.xlu0 %412
    %414 = vrot.lane.b32.xlu0 %v401, 68
    %v415 = vpop.permute.xlu0 %414
    %v418 = vmul.f32 %v397, %v413
    %v419 = vmul.f32 %v399, %v415
    %422 = vrot.lane.b32.xlu0 %v418, 20
    %v423 = vpop.permute.xlu0 %422
    %424 = vrot.lane.b32.xlu0 %v419, 20
    %v425 = vpop.permute.xlu0 %424
    %v428 = vadd.f32 %v408, %v423
    %v429 = vadd.f32 %v409, %v425
    %v430 = vtanh.pop %v428
    %v431 = vtanh.pop %v429
    %434 = vrot.lane.b32.xlu0 %v430, 20
    %v435 = vpop.permute.xlu0 %434
    %436 = vrot.lane.b32.xlu0 %v431, 20
    %v437 = vpop.permute.xlu0 %436
    %v440 = vmul.f32 %v397, %v435
    %v441 = vmul.f32 %v399, %v437
    %v442 = vpack.c.bf16 %v440, %v440
    %v443 = vpack.c.bf16 %v441, %v441
    %v444 = vpack.c.bf16 %v341, %v341
    %446 = vrot.lane.b32.xlu0 %v444, 88
    %v447 = vpop.permute.xlu0 %446
    %v449 = vsel %vm96, %v447, 0
    %451 = vmatprep.subr.bf16.mxu0 0
    %452 = vmatpush1.bf16.msra.mxu0 0
    %453 = vmatprep.subr.bf16.mxu0 0
    %454 = vmatpush1.bf16.msra.mxu0 0
    %455 = vmatprep.subr.bf16.mxu0 0
    %456 = vmatpush1.bf16.msra.mxu0 0
    %457 = vmatprep.subr.bf16.mxu0 0
    %458 = vmatpush1.bf16.msra.mxu0 0
    %459 = vmatprep.subr.bf16.mxu0 0
    %460 = vmatpush1.bf16.msra.mxu0 0
    %461 = vmatprep.subr.bf16.mxu0 0
    %462 = vmatpush1.bf16.msra.mxu0 0
    %463 = vmatprep.subr.bf16.mxu0 0
    %464 = vmatpush1.bf16.msra.mxu0 %v210
    %465 = vmatprep.subr.bf16.mxu0 0
    %466 = vmatpush1.bf16.msra.mxu0 %v206
    %467 = vmatprep.subr.bf16.mxu0 0
    %468 = vmatpush2.bf16.msra.mxu0 0
    %469 = vmatprep.subr.bf16.mxu0 0
    %470 = vmatpush2.bf16.msra.mxu0 0
    %471 = vmatprep.subr.bf16.mxu0 0
    %472 = vmatpush2.bf16.msra.mxu0 0
    %473 = vmatprep.subr.bf16.mxu0 0
    %474 = vmatpush2.bf16.msra.mxu0 0
    %475 = vmatprep.subr.bf16.mxu0 0
    %476 = vmatpush2.bf16.msra.mxu0 0
    %477 = vmatprep.subr.bf16.mxu0 0
    %478 = vmatpush2.bf16.msra.mxu0 0
    %479 = vmatprep.subr.bf16.mxu0 0
    %480 = vmatpush2.bf16.msra.mxu0 0
    %481 = vmatprep.subr.bf16.mxu0 0
    %482 = vmatpush2.bf16.msra.mxu0 0
    %483 = vmatprep.mubr.bf16.mxu0 0
    %484 = vmatmul.mubr.bf16.gmra.mxu0 %v449
    %v485 = vpop.f32.mrf.mxu0
    %v486 = vadd.f32 0.0, %v485
    %v487 = vpop.f32.mrf.mxu0
    %v488 = vpop.f32.mrf.mxu0
    %v489 = vpop.f32.mrf.mxu0
    %490 = vdwg.mxu0
    %v493 = vunpack.c.l.b16 %v442
    %v494 = vunpack.c.l.b16 %v443
    %v495 = vrot.slane %v493, 1
    %v496 = vsel %vm257, %v494, %v495
    %v497 = vpack.c.b16 %v496, %v496
    %498 = vrot.lane.b32.xlu0 %v497, 88
    %v499 = vpop.permute.xlu0 %498
    %v501 = vsel %vm96, %v499, 0
    %503 = vmatprep.subr.bf16.mxu0 0
    %504 = vmatpush1.bf16.msra.mxu0 0
    %505 = vmatprep.subr.bf16.mxu0 0
    %506 = vmatpush1.bf16.msra.mxu0 0
    %507 = vmatprep.subr.bf16.mxu0 0
    %508 = vmatpush1.bf16.msra.mxu0 0
    %509 = vmatprep.subr.bf16.mxu0 0
    %510 = vmatpush1.bf16.msra.mxu0 0
    %511 = vmatprep.subr.bf16.mxu0 0
    %512 = vmatpush1.bf16.msra.mxu0 0
    %513 = vmatprep.subr.bf16.mxu0 0
    %514 = vmatpush1.bf16.msra.mxu0 0
    %515 = vmatprep.subr.bf16.mxu0 0
    %516 = vmatpush1.bf16.msra.mxu0 %v275
    %517 = vmatprep.subr.bf16.mxu0 0
    %518 = vmatpush1.bf16.msra.mxu0 %v268
    %519 = vmatprep.subr.bf16.mxu0 0
    %520 = vmatpush2.bf16.msra.mxu0 0
    %521 = vmatprep.subr.bf16.mxu0 0
    %522 = vmatpush2.bf16.msra.mxu0 0
    %523 = vmatprep.subr.bf16.mxu0 0
    %524 = vmatpush2.bf16.msra.mxu0 0
    %525 = vmatprep.subr.bf16.mxu0 0
    %526 = vmatpush2.bf16.msra.mxu0 0
    %527 = vmatprep.subr.bf16.mxu0 0
    %528 = vmatpush2.bf16.msra.mxu0 0
    %529 = vmatprep.subr.bf16.mxu0 0
    %530 = vmatpush2.bf16.msra.mxu0 0
    %531 = vmatprep.subr.bf16.mxu0 0
    %532 = vmatpush2.bf16.msra.mxu0 0
    %533 = vmatprep.subr.bf16.mxu0 0
    %534 = vmatpush2.bf16.msra.mxu0 0
    %535 = vmatprep.mubr.bf16.mxu0 0
    %536 = vmatmul.mubr.bf16.gmra.mxu0 %v501
    %v537 = vpop.f32.mrf.mxu0
    %v538 = vadd.f32 %v486, %v537
    %v539 = vpop.f32.mrf.mxu0
    %v540 = vpop.f32.mrf.mxu0
    %v541 = vpop.f32.mrf.mxu0
    %542 = vdwg.mxu0
    %v543 = vadd.f32 %v538, %v48
    %v544 = vxor.u32 %v543, 2147483648
    %v545 = vmul.f32 %v544, 1.442695
    %v546 = vpow.pop %v545
    %v547 = vadd.f32 %v546, 1.0
    %v548 = vrcp.pop %v547
    %v549 = vmul.f32 1.0, %v548
    %v550 = vtanh.pop %v543
    %v551 = vmul.f32 %v549, %v335
    %553 = vrot.lane.b32.xlu0 %v550, 68
    %v554 = vpop.permute.xlu0 %553
    %v556 = vmul.f32 %v549, %v554
    %558 = vrot.lane.b32.xlu0 %v556, 20
    %v559 = vpop.permute.xlu0 %558
    %v561 = vadd.f32 %v551, %v559
    %v562 = vtanh.pop %v561
    %564 = vrot.lane.b32.xlu0 %v562, 20
    %v565 = vpop.permute.xlu0 %564
    %v567 = vmul.f32 %v549, %v565
    %568 = vmatprep.subr.bf16.mxu0 0
    %569 = vmatpush1.bf16.msra.mxu0 0
    %570 = vmatprep.subr.bf16.mxu0 0
    %571 = vmatpush1.bf16.msra.mxu0 0
    %572 = vmatprep.subr.bf16.mxu0 0
    %573 = vmatpush1.bf16.msra.mxu0 0
    %574 = vmatprep.subr.bf16.mxu0 0
    %575 = vmatpush1.bf16.msra.mxu0 0
    %576 = vmatprep.subr.bf16.mxu0 0
    %577 = vmatpush1.bf16.msra.mxu0 0
    %578 = vmatprep.subr.bf16.mxu0 0
    %579 = vmatpush1.bf16.msra.mxu0 0
    %580 = vmatprep.subr.bf16.mxu0 0
    %581 = vmatpush1.bf16.msra.mxu0 %v102
    %582 = vmatprep.subr.bf16.mxu0 0
    %583 = vmatpush1.bf16.msra.mxu0 %v93
    %584 = vmatprep.subr.bf16.mxu0 0
    %585 = vmatpush2.bf16.msra.mxu0 0
    %586 = vmatprep.subr.bf16.mxu0 0
    %587 = vmatpush2.bf16.msra.mxu0 0
    %588 = vmatprep.subr.bf16.mxu0 0
    %589 = vmatpush2.bf16.msra.mxu0 0
    %590 = vmatprep.subr.bf16.mxu0 0
    %591 = vmatpush2.bf16.msra.mxu0 0
    %592 = vmatprep.subr.bf16.mxu0 0
    %593 = vmatpush2.bf16.msra.mxu0 0
    %594 = vmatprep.subr.bf16.mxu0 0
    %595 = vmatpush2.bf16.msra.mxu0 0
    %596 = vmatprep.subr.bf16.mxu0 0
    %597 = vmatpush2.bf16.msra.mxu0 0
    %598 = vmatprep.subr.bf16.mxu0 0
    %599 = vmatpush2.bf16.msra.mxu0 0
    %600 = vmatprep.mubr.bf16.mxu0 0
    %601 = vmatmul.mubr.bf16.gmra.mxu0 %v501
    %v602 = vpop.f32.mrf.mxu0
    %v603 = vadd.f32 0.0, %v602
    %v604 = vpop.f32.mrf.mxu0
    %v605 = vpop.f32.mrf.mxu0
    %v606 = vpop.f32.mrf.mxu0
    %607 = vdwg.mxu0
    %v609 = vrot.slane %v603, 6
    %v610 = vrot.slane %v603, 7
    %v613 = vadd.f32 %v85, %v609
    %v614 = vadd.f32 %v86, %v610
    %v615 = vxor.u32 %v613, 2147483648
    %v616 = vxor.u32 %v614, 2147483648
    %v617 = vmul.f32 %v615, 1.442695
    %v618 = vpow.pop %v617
    %v619 = vmul.f32 %v616, 1.442695
    %v620 = vpow.pop %v619
    %v621 = vadd.f32 %v618, 1.0
    %v622 = vadd.f32 %v620, 1.0
    %v623 = vrcp.pop %v621
    %v624 = vmul.f32 1.0, %v623
    %v625 = vrcp.pop %v622
    %v626 = vmul.f32 1.0, %v625
    %v627 = vtanh.pop %v613
    %v628 = vtanh.pop %v614
    %v631 = vrot.slane %v428, 7
    %v632 = vrot.slane %v429, 7
    %v635 = vmul.f32 %v624, %v631
    %v636 = vmul.f32 %v626, %v632
    %639 = vrot.lane.b32.xlu0 %v627, 68
    %v640 = vpop.permute.xlu0 %639
    %641 = vrot.lane.b32.xlu0 %v628, 68
    %v642 = vpop.permute.xlu0 %641
    %v645 = vmul.f32 %v624, %v640
    %v646 = vmul.f32 %v626, %v642
    %649 = vrot.lane.b32.xlu0 %v645, 20
    %v650 = vpop.permute.xlu0 %649
    %651 = vrot.lane.b32.xlu0 %v646, 20
    %v652 = vpop.permute.xlu0 %651
    %v655 = vadd.f32 %v635, %v650
    %v656 = vadd.f32 %v636, %v652
    %v657 = vtanh.pop %v655
    %v658 = vtanh.pop %v656
    %661 = vrot.lane.b32.xlu0 %v657, 20
    %v662 = vpop.permute.xlu0 %661
    %663 = vrot.lane.b32.xlu0 %v658, 20
    %v664 = vpop.permute.xlu0 %663
    %v667 = vmul.f32 %v624, %v662
    %v668 = vmul.f32 %v626, %v664
    %v669 = vpack.c.bf16 %v667, %v667
    %v670 = vpack.c.bf16 %v668, %v668
    %v671 = vpack.c.bf16 %v567, %v567
    %673 = vrot.lane.b32.xlu0 %v671, 88
    %v674 = vpop.permute.xlu0 %673
    %v676 = vsel %vm96, %v674, 0
    %678 = vmatprep.subr.bf16.mxu0 0
    %679 = vmatpush1.bf16.msra.mxu0 0
    %680 = vmatprep.subr.bf16.mxu0 0
    %681 = vmatpush1.bf16.msra.mxu0 0
    %682 = vmatprep.subr.bf16.mxu0 0
    %683 = vmatpush1.bf16.msra.mxu0 0
    %684 = vmatprep.subr.bf16.mxu0 0
    %685 = vmatpush1.bf16.msra.mxu0 0
    %686 = vmatprep.subr.bf16.mxu0 0
    %687 = vmatpush1.bf16.msra.mxu0 0
    %688 = vmatprep.subr.bf16.mxu0 0
    %689 = vmatpush1.bf16.msra.mxu0 0
    %690 = vmatprep.subr.bf16.mxu0 0
    %691 = vmatpush1.bf16.msra.mxu0 %v210
    %692 = vmatprep.subr.bf16.mxu0 0
    %693 = vmatpush1.bf16.msra.mxu0 %v206
    %694 = vmatprep.subr.bf16.mxu0 0
    %695 = vmatpush2.bf16.msra.mxu0 0
    %696 = vmatprep.subr.bf16.mxu0 0
    %697 = vmatpush2.bf16.msra.mxu0 0
    %698 = vmatprep.subr.bf16.mxu0 0
    %699 = vmatpush2.bf16.msra.mxu0 0
    %700 = vmatprep.subr.bf16.mxu0 0
    %701 = vmatpush2.bf16.msra.mxu0 0
    %702 = vmatprep.subr.bf16.mxu0 0
    %703 = vmatpush2.bf16.msra.mxu0 0
    %704 = vmatprep.subr.bf16.mxu0 0
    %705 = vmatpush2.bf16.msra.mxu0 0
    %706 = vmatprep.subr.bf16.mxu0 0
    %707 = vmatpush2.bf16.msra.mxu0 0
    %708 = vmatprep.subr.bf16.mxu0 0
    %709 = vmatpush2.bf16.msra.mxu0 0
    %710 = vmatprep.mubr.bf16.mxu0 0
    %711 = vmatmul.mubr.bf16.gmra.mxu0 %v676
    %v712 = vpop.f32.mrf.mxu0
    %v713 = vadd.f32 0.0, %v712
    %v714 = vpop.f32.mrf.mxu0
    %v715 = vpop.f32.mrf.mxu0
    %v716 = vpop.f32.mrf.mxu0
    %717 = vdwg.mxu0
    %v720 = vunpack.c.l.b16 %v669
    %v721 = vunpack.c.l.b16 %v670
    %v722 = vrot.slane %v720, 2
    %v723 = vrot.slane %v721, 1
    %v724 = vsel %vm257, %v723, %v722
    %v725 = vpack.c.b16 %v724, %v724
    %726 = vrot.lane.b32.xlu0 %v725, 88
    %v727 = vpop.permute.xlu0 %726
    %v729 = vsel %vm96, %v727, 0
    %731 = vmatprep.subr.bf16.mxu0 0
    %732 = vmatpush1.bf16.msra.mxu0 0
    %733 = vmatprep.subr.bf16.mxu0 0
    %734 = vmatpush1.bf16.msra.mxu0 0
    %735 = vmatprep.subr.bf16.mxu0 0
    %736 = vmatpush1.bf16.msra.mxu0 0
    %737 = vmatprep.subr.bf16.mxu0 0
    %738 = vmatpush1.bf16.msra.mxu0 0
    %739 = vmatprep.subr.bf16.mxu0 0
    %740 = vmatpush1.bf16.msra.mxu0 0
    %741 = vmatprep.subr.bf16.mxu0 0
    %742 = vmatpush1.bf16.msra.mxu0 0
    %743 = vmatprep.subr.bf16.mxu0 0
    %744 = vmatpush1.bf16.msra.mxu0 %v275
    %745 = vmatprep.subr.bf16.mxu0 0
    %746 = vmatpush1.bf16.msra.mxu0 %v268
    %747 = vmatprep.subr.bf16.mxu0 0
    %748 = vmatpush2.bf16.msra.mxu0 0
    %749 = vmatprep.subr.bf16.mxu0 0
    %750 = vmatpush2.bf16.msra.mxu0 0
    %751 = vmatprep.subr.bf16.mxu0 0
    %752 = vmatpush2.bf16.msra.mxu0 0
    %753 = vmatprep.subr.bf16.mxu0 0
    %754 = vmatpush2.bf16.msra.mxu0 0
    %755 = vmatprep.subr.bf16.mxu0 0
    %756 = vmatpush2.bf16.msra.mxu0 0
    %757 = vmatprep.subr.bf16.mxu0 0
    %758 = vmatpush2.bf16.msra.mxu0 0
    %759 = vmatprep.subr.bf16.mxu0 0
    %760 = vmatpush2.bf16.msra.mxu0 0
    %761 = vmatprep.subr.bf16.mxu0 0
    %762 = vmatpush2.bf16.msra.mxu0 0
    %763 = vmatprep.mubr.bf16.mxu0 0
    %764 = vmatmul.mubr.bf16.gmra.mxu0 %v729
    %v765 = vpop.f32.mrf.mxu0
    %v766 = vadd.f32 %v713, %v765
    %v767 = vpop.f32.mrf.mxu0
    %v768 = vpop.f32.mrf.mxu0
    %v769 = vpop.f32.mrf.mxu0
    %770 = vdwg.mxu0
    %v771 = vadd.f32 %v766, %v48
    %v772 = vxor.u32 %v771, 2147483648
    %v773 = vmul.f32 %v772, 1.442695
    %v774 = vpow.pop %v773
    %v775 = vadd.f32 %v774, 1.0
    %v776 = vrcp.pop %v775
    %v777 = vmul.f32 1.0, %v776
    %v778 = vtanh.pop %v771
    %v779 = vmul.f32 %v777, %v561
    %781 = vrot.lane.b32.xlu0 %v778, 68
    %v782 = vpop.permute.xlu0 %781
    %v784 = vmul.f32 %v777, %v782
    %786 = vrot.lane.b32.xlu0 %v784, 20
    %v787 = vpop.permute.xlu0 %786
    %v789 = vadd.f32 %v779, %v787
    %v790 = vtanh.pop %v789
    %792 = vrot.lane.b32.xlu0 %v790, 20
    %v793 = vpop.permute.xlu0 %792
    %v795 = vmul.f32 %v777, %v793
    %796 = vmatprep.subr.bf16.mxu0 0
    %797 = vmatpush1.bf16.msra.mxu0 0
    %798 = vmatprep.subr.bf16.mxu0 0
    %799 = vmatpush1.bf16.msra.mxu0 0
    %800 = vmatprep.subr.bf16.mxu0 0
    %801 = vmatpush1.bf16.msra.mxu0 0
    %802 = vmatprep.subr.bf16.mxu0 0
    %803 = vmatpush1.bf16.msra.mxu0 0
    %804 = vmatprep.subr.bf16.mxu0 0
    %805 = vmatpush1.bf16.msra.mxu0 0
    %806 = vmatprep.subr.bf16.mxu0 0
    %807 = vmatpush1.bf16.msra.mxu0 0
    %808 = vmatprep.subr.bf16.mxu0 0
    %809 = vmatpush1.bf16.msra.mxu0 %v102
    %810 = vmatprep.subr.bf16.mxu0 0
    %811 = vmatpush1.bf16.msra.mxu0 %v93
    %812 = vmatprep.subr.bf16.mxu0 0
    %813 = vmatpush2.bf16.msra.mxu0 0
    %814 = vmatprep.subr.bf16.mxu0 0
    %815 = vmatpush2.bf16.msra.mxu0 0
    %816 = vmatprep.subr.bf16.mxu0 0
    %817 = vmatpush2.bf16.msra.mxu0 0
    %818 = vmatprep.subr.bf16.mxu0 0
    %819 = vmatpush2.bf16.msra.mxu0 0
    %820 = vmatprep.subr.bf16.mxu0 0
    %821 = vmatpush2.bf16.msra.mxu0 0
    %822 = vmatprep.subr.bf16.mxu0 0
    %823 = vmatpush2.bf16.msra.mxu0 0
    %824 = vmatprep.subr.bf16.mxu0 0
    %825 = vmatpush2.bf16.msra.mxu0 0
    %826 = vmatprep.subr.bf16.mxu0 0
    %827 = vmatpush2.bf16.msra.mxu0 0
    %828 = vmatprep.mubr.bf16.mxu0 0
    %829 = vmatmul.mubr.bf16.gmra.mxu0 %v729
    %v830 = vpop.f32.mrf.mxu0
    %v831 = vadd.f32 0.0, %v830
    %v832 = vpop.f32.mrf.mxu0
    %v833 = vpop.f32.mrf.mxu0
    %v834 = vpop.f32.mrf.mxu0
    %835 = vdwg.mxu0
    %v837 = vrot.slane %v831, 5
    %v838 = vrot.slane %v831, 6
    %v841 = vadd.f32 %v85, %v837
    %v842 = vadd.f32 %v86, %v838
    %v843 = vxor.u32 %v841, 2147483648
    %v844 = vxor.u32 %v842, 2147483648
    %v845 = vmul.f32 %v843, 1.442695
    %v846 = vpow.pop %v845
    %v847 = vmul.f32 %v844, 1.442695
    %v848 = vpow.pop %v847
    %v849 = vadd.f32 %v846, 1.0
    %v850 = vadd.f32 %v848, 1.0
    %v851 = vrcp.pop %v849
    %v852 = vmul.f32 1.0, %v851
    %v853 = vrcp.pop %v850
    %v854 = vmul.f32 1.0, %v853
    %v855 = vtanh.pop %v841
    %v856 = vtanh.pop %v842
    %v859 = vrot.slane %v655, 7
    %v860 = vrot.slane %v656, 7
    %v863 = vmul.f32 %v852, %v859
    %v864 = vmul.f32 %v854, %v860
    %867 = vrot.lane.b32.xlu0 %v855, 68
    %v868 = vpop.permute.xlu0 %867
    %869 = vrot.lane.b32.xlu0 %v856, 68
    %v870 = vpop.permute.xlu0 %869
    %v873 = vmul.f32 %v852, %v868
    %v874 = vmul.f32 %v854, %v870
    %877 = vrot.lane.b32.xlu0 %v873, 20
    %v878 = vpop.permute.xlu0 %877
    %879 = vrot.lane.b32.xlu0 %v874, 20
    %v880 = vpop.permute.xlu0 %879
    %v883 = vadd.f32 %v863, %v878
    %v884 = vadd.f32 %v864, %v880
    %v885 = vtanh.pop %v883
    %v886 = vtanh.pop %v884
    %889 = vrot.lane.b32.xlu0 %v885, 20
    %v890 = vpop.permute.xlu0 %889
    %891 = vrot.lane.b32.xlu0 %v886, 20
    %v892 = vpop.permute.xlu0 %891
    %v895 = vmul.f32 %v852, %v890
    %v896 = vmul.f32 %v854, %v892
    %v897 = vpack.c.bf16 %v895, %v895
    %v898 = vpack.c.bf16 %v896, %v896
    %v899 = vpack.c.bf16 %v795, %v795
    %901 = vrot.lane.b32.xlu0 %v899, 88
    %v902 = vpop.permute.xlu0 %901
    %v904 = vsel %vm96, %v902, 0
    %906 = vmatprep.subr.bf16.mxu0 0
    %907 = vmatpush1.bf16.msra.mxu0 0
    %908 = vmatprep.subr.bf16.mxu0 0
    %909 = vmatpush1.bf16.msra.mxu0 0
    %910 = vmatprep.subr.bf16.mxu0 0
    %911 = vmatpush1.bf16.msra.mxu0 0
    %912 = vmatprep.subr.bf16.mxu0 0
    %913 = vmatpush1.bf16.msra.mxu0 0
    %914 = vmatprep.subr.bf16.mxu0 0
    %915 = vmatpush1.bf16.msra.mxu0 0
    %916 = vmatprep.subr.bf16.mxu0 0
    %917 = vmatpush1.bf16.msra.mxu0 0
    %918 = vmatprep.subr.bf16.mxu0 0
    %919 = vmatpush1.bf16.msra.mxu0 %v210
    %920 = vmatprep.subr.bf16.mxu0 0
    %921 = vmatpush1.bf16.msra.mxu0 %v206
    %922 = vmatprep.subr.bf16.mxu0 0
    %923 = vmatpush2.bf16.msra.mxu0 0
    %924 = vmatprep.subr.bf16.mxu0 0
    %925 = vmatpush2.bf16.msra.mxu0 0
    %926 = vmatprep.subr.bf16.mxu0 0
    %927 = vmatpush2.bf16.msra.mxu0 0
    %928 = vmatprep.subr.bf16.mxu0 0
    %929 = vmatpush2.bf16.msra.mxu0 0
    %930 = vmatprep.subr.bf16.mxu0 0
    %931 = vmatpush2.bf16.msra.mxu0 0
    %932 = vmatprep.subr.bf16.mxu0 0
    %933 = vmatpush2.bf16.msra.mxu0 0
    %934 = vmatprep.subr.bf16.mxu0 0
    %935 = vmatpush2.bf16.msra.mxu0 0
    %936 = vmatprep.subr.bf16.mxu0 0
    %937 = vmatpush2.bf16.msra.mxu0 0
    %938 = vmatprep.mubr.bf16.mxu0 0
    %939 = vmatmul.mubr.bf16.gmra.mxu0 %v904
    %v940 = vpop.f32.mrf.mxu0
    %v941 = vadd.f32 0.0, %v940
    %v942 = vpop.f32.mrf.mxu0
    %v943 = vpop.f32.mrf.mxu0
    %v944 = vpop.f32.mrf.mxu0
    %945 = vdwg.mxu0
    %v948 = vunpack.c.l.b16 %v897
    %v949 = vunpack.c.l.b16 %v898
    %v950 = vrot.slane %v948, 3
    %v951 = vrot.slane %v949, 2
    %v952 = vsel %vm257, %v951, %v950
    %v953 = vpack.c.b16 %v952, %v952
    %954 = vrot.lane.b32.xlu0 %v953, 88
    %v955 = vpop.permute.xlu0 %954
    %v957 = vsel %vm96, %v955, 0
    %959 = vmatprep.subr.bf16.mxu0 0
    %960 = vmatpush1.bf16.msra.mxu0 0
    %961 = vmatprep.subr.bf16.mxu0 0
    %962 = vmatpush1.bf16.msra.mxu0 0
    %963 = vmatprep.subr.bf16.mxu0 0
    %964 = vmatpush1.bf16.msra.mxu0 0
    %965 = vmatprep.subr.bf16.mxu0 0
    %966 = vmatpush1.bf16.msra.mxu0 0
    %967 = vmatprep.subr.bf16.mxu0 0
    %968 = vmatpush1.bf16.msra.mxu0 0
    %969 = vmatprep.subr.bf16.mxu0 0
    %970 = vmatpush1.bf16.msra.mxu0 0
    %971 = vmatprep.subr.bf16.mxu0 0
    %972 = vmatpush1.bf16.msra.mxu0 %v275
    %973 = vmatprep.subr.bf16.mxu0 0
    %974 = vmatpush1.bf16.msra.mxu0 %v268
    %975 = vmatprep.subr.bf16.mxu0 0
    %976 = vmatpush2.bf16.msra.mxu0 0
    %977 = vmatprep.subr.bf16.mxu0 0
    %978 = vmatpush2.bf16.msra.mxu0 0
    %979 = vmatprep.subr.bf16.mxu0 0
    %980 = vmatpush2.bf16.msra.mxu0 0
    %981 = vmatprep.subr.bf16.mxu0 0
    %982 = vmatpush2.bf16.msra.mxu0 0
    %983 = vmatprep.subr.bf16.mxu0 0
    %984 = vmatpush2.bf16.msra.mxu0 0
    %985 = vmatprep.subr.bf16.mxu0 0
    %986 = vmatpush2.bf16.msra.mxu0 0
    %987 = vmatprep.subr.bf16.mxu0 0
    %988 = vmatpush2.bf16.msra.mxu0 0
    %989 = vmatprep.subr.bf16.mxu0 0
    %990 = vmatpush2.bf16.msra.mxu0 0
    %991 = vmatprep.mubr.bf16.mxu0 0
    %992 = vmatmul.mubr.bf16.gmra.mxu0 %v957
    %v993 = vpop.f32.mrf.mxu0
    %v994 = vadd.f32 %v941, %v993
    %v995 = vpop.f32.mrf.mxu0
    %v996 = vpop.f32.mrf.mxu0
    %v997 = vpop.f32.mrf.mxu0
    %998 = vdwg.mxu0
    %v999 = vadd.f32 %v994, %v48
    %v1000 = vxor.u32 %v999, 2147483648
    %v1001 = vmul.f32 %v1000, 1.442695
    %v1002 = vpow.pop %v1001
    %v1003 = vadd.f32 %v1002, 1.0
    %v1004 = vrcp.pop %v1003
    %v1005 = vmul.f32 1.0, %v1004
    %v1006 = vtanh.pop %v999
    %v1007 = vmul.f32 %v1005, %v789
    %1009 = vrot.lane.b32.xlu0 %v1006, 68
    %v1010 = vpop.permute.xlu0 %1009
    %v1012 = vmul.f32 %v1005, %v1010
    %1014 = vrot.lane.b32.xlu0 %v1012, 20
    %v1015 = vpop.permute.xlu0 %1014
    %v1017 = vadd.f32 %v1007, %v1015
    %v1018 = vtanh.pop %v1017
    %1020 = vrot.lane.b32.xlu0 %v1018, 20
    %v1021 = vpop.permute.xlu0 %1020
    %v1023 = vmul.f32 %v1005, %v1021
    %1024 = vmatprep.subr.bf16.mxu0 0
    %1025 = vmatpush1.bf16.msra.mxu0 0
    %1026 = vmatprep.subr.bf16.mxu0 0
    %1027 = vmatpush1.bf16.msra.mxu0 0
    %1028 = vmatprep.subr.bf16.mxu0 0
    %1029 = vmatpush1.bf16.msra.mxu0 0
    %1030 = vmatprep.subr.bf16.mxu0 0
    %1031 = vmatpush1.bf16.msra.mxu0 0
    %1032 = vmatprep.subr.bf16.mxu0 0
    %1033 = vmatpush1.bf16.msra.mxu0 0
    %1034 = vmatprep.subr.bf16.mxu0 0
    %1035 = vmatpush1.bf16.msra.mxu0 0
    %1036 = vmatprep.subr.bf16.mxu0 0
    %1037 = vmatpush1.bf16.msra.mxu0 %v102
    %1038 = vmatprep.subr.bf16.mxu0 0
    %1039 = vmatpush1.bf16.msra.mxu0 %v93
    %1040 = vmatprep.subr.bf16.mxu0 0
    %1041 = vmatpush2.bf16.msra.mxu0 0
    %1042 = vmatprep.subr.bf16.mxu0 0
    %1043 = vmatpush2.bf16.msra.mxu0 0
    %1044 = vmatprep.subr.bf16.mxu0 0
    %1045 = vmatpush2.bf16.msra.mxu0 0
    %1046 = vmatprep.subr.bf16.mxu0 0
    %1047 = vmatpush2.bf16.msra.mxu0 0
    %1048 = vmatprep.subr.bf16.mxu0 0
    %1049 = vmatpush2.bf16.msra.mxu0 0
    %1050 = vmatprep.subr.bf16.mxu0 0
    %1051 = vmatpush2.bf16.msra.mxu0 0
    %1052 = vmatprep.subr.bf16.mxu0 0
    %1053 = vmatpush2.bf16.msra.mxu0 0
    %1054 = vmatprep.subr.bf16.mxu0 0
    %1055 = vmatpush2.bf16.msra.mxu0 0
    %1056 = vmatprep.mubr.bf16.mxu0 0
    %1057 = vmatmul.mubr.bf16.gmra.mxu0 %v957
    %v1058 = vpop.f32.mrf.mxu0
    %v1059 = vadd.f32 0.0, %v1058
    %v1060 = vpop.f32.mrf.mxu0
    %v1061 = vpop.f32.mrf.mxu0
    %v1062 = vpop.f32.mrf.mxu0
    %1063 = vdwg.mxu0
    %v1065 = vrot.slane %v1059, 4
    %v1066 = vrot.slane %v1059, 5
    %v1069 = vadd.f32 %v85, %v1065
    %v1070 = vadd.f32 %v86, %v1066
    %v1071 = vxor.u32 %v1069, 2147483648
    %v1072 = vxor.u32 %v1070, 2147483648
    %v1073 = vmul.f32 %v1071, 1.442695
    %v1074 = vpow.pop %v1073
    %v1075 = vmul.f32 %v1072, 1.442695
    %v1076 = vpow.pop %v1075
    %v1077 = vadd.f32 %v1074, 1.0
    %v1078 = vadd.f32 %v1076, 1.0
    %v1079 = vrcp.pop %v1077
    %v1080 = vmul.f32 1.0, %v1079
    %v1081 = vrcp.pop %v1078
    %v1082 = vmul.f32 1.0, %v1081
    %v1083 = vtanh.pop %v1069
    %v1084 = vtanh.pop %v1070
    %v1087 = vrot.slane %v883, 7
    %v1088 = vrot.slane %v884, 7
    %v1091 = vmul.f32 %v1080, %v1087
    %v1092 = vmul.f32 %v1082, %v1088
    %1095 = vrot.lane.b32.xlu0 %v1083, 68
    %v1096 = vpop.permute.xlu0 %1095
    %1097 = vrot.lane.b32.xlu0 %v1084, 68
    %v1098 = vpop.permute.xlu0 %1097
    %v1101 = vmul.f32 %v1080, %v1096
    %v1102 = vmul.f32 %v1082, %v1098
    %1105 = vrot.lane.b32.xlu0 %v1101, 20
    %v1106 = vpop.permute.xlu0 %1105
    %1107 = vrot.lane.b32.xlu0 %v1102, 20
    %v1108 = vpop.permute.xlu0 %1107
    %v1111 = vadd.f32 %v1091, %v1106
    %v1112 = vadd.f32 %v1092, %v1108
    %v1113 = vtanh.pop %v1111
    %v1114 = vtanh.pop %v1112
    %1117 = vrot.lane.b32.xlu0 %v1113, 20
    %v1118 = vpop.permute.xlu0 %1117
    %1119 = vrot.lane.b32.xlu0 %v1114, 20
    %v1120 = vpop.permute.xlu0 %1119
    %v1123 = vmul.f32 %v1080, %v1118
    %v1124 = vmul.f32 %v1082, %v1120
    %v1125 = vpack.c.bf16 %v1123, %v1123
    %v1126 = vpack.c.bf16 %v1124, %v1124
    %v1127 = vpack.c.bf16 %v1023, %v1023
    %1129 = vrot.lane.b32.xlu0 %v1127, 88
    %v1130 = vpop.permute.xlu0 %1129
    %v1132 = vsel %vm96, %v1130, 0
    %1134 = vmatprep.subr.bf16.mxu0 0
    %1135 = vmatpush1.bf16.msra.mxu0 0
    %1136 = vmatprep.subr.bf16.mxu0 0
    %1137 = vmatpush1.bf16.msra.mxu0 0
    %1138 = vmatprep.subr.bf16.mxu0 0
    %1139 = vmatpush1.bf16.msra.mxu0 0
    %1140 = vmatprep.subr.bf16.mxu0 0
    %1141 = vmatpush1.bf16.msra.mxu0 0
    %1142 = vmatprep.subr.bf16.mxu0 0
    %1143 = vmatpush1.bf16.msra.mxu0 0
    %1144 = vmatprep.subr.bf16.mxu0 0
    %1145 = vmatpush1.bf16.msra.mxu0 0
    %1146 = vmatprep.subr.bf16.mxu0 0
    %1147 = vmatpush1.bf16.msra.mxu0 %v210
    %1148 = vmatprep.subr.bf16.mxu0 0
    %1149 = vmatpush1.bf16.msra.mxu0 %v206
    %1150 = vmatprep.subr.bf16.mxu0 0
    %1151 = vmatpush2.bf16.msra.mxu0 0
    %1152 = vmatprep.subr.bf16.mxu0 0
    %1153 = vmatpush2.bf16.msra.mxu0 0
    %1154 = vmatprep.subr.bf16.mxu0 0
    %1155 = vmatpush2.bf16.msra.mxu0 0
    %1156 = vmatprep.subr.bf16.mxu0 0
    %1157 = vmatpush2.bf16.msra.mxu0 0
    %1158 = vmatprep.subr.bf16.mxu0 0
    %1159 = vmatpush2.bf16.msra.mxu0 0
    %1160 = vmatprep.subr.bf16.mxu0 0
    %1161 = vmatpush2.bf16.msra.mxu0 0
    %1162 = vmatprep.subr.bf16.mxu0 0
    %1163 = vmatpush2.bf16.msra.mxu0 0
    %1164 = vmatprep.subr.bf16.mxu0 0
    %1165 = vmatpush2.bf16.msra.mxu0 0
    %1166 = vmatprep.mubr.bf16.mxu0 0
    %1167 = vmatmul.mubr.bf16.gmra.mxu0 %v1132
    %v1168 = vpop.f32.mrf.mxu0
    %v1169 = vadd.f32 0.0, %v1168
    %v1170 = vpop.f32.mrf.mxu0
    %v1171 = vpop.f32.mrf.mxu0
    %v1172 = vpop.f32.mrf.mxu0
    %1173 = vdwg.mxu0
    %v1176 = vunpack.c.l.b16 %v1125
    %v1177 = vunpack.c.l.b16 %v1126
    %v1178 = vrot.slane %v1176, 4
    %v1179 = vrot.slane %v1177, 3
    %v1180 = vsel %vm257, %v1179, %v1178
    %v1181 = vpack.c.b16 %v1180, %v1180
    %1182 = vrot.lane.b32.xlu0 %v1181, 88
    %v1183 = vpop.permute.xlu0 %1182
    %v1185 = vsel %vm96, %v1183, 0
    %1187 = vmatprep.subr.bf16.mxu0 0
    %1188 = vmatpush1.bf16.msra.mxu0 0
    %1189 = vmatprep.subr.bf16.mxu0 0
    %1190 = vmatpush1.bf16.msra.mxu0 0
    %1191 = vmatprep.subr.bf16.mxu0 0
    %1192 = vmatpush1.bf16.msra.mxu0 0
    %1193 = vmatprep.subr.bf16.mxu0 0
    %1194 = vmatpush1.bf16.msra.mxu0 0
    %1195 = vmatprep.subr.bf16.mxu0 0
    %1196 = vmatpush1.bf16.msra.mxu0 0
    %1197 = vmatprep.subr.bf16.mxu0 0
    %1198 = vmatpush1.bf16.msra.mxu0 0
    %1199 = vmatprep.subr.bf16.mxu0 0
    %1200 = vmatpush1.bf16.msra.mxu0 %v275
    %1201 = vmatprep.subr.bf16.mxu0 0
    %1202 = vmatpush1.bf16.msra.mxu0 %v268
    %1203 = vmatprep.subr.bf16.mxu0 0
    %1204 = vmatpush2.bf16.msra.mxu0 0
    %1205 = vmatprep.subr.bf16.mxu0 0
    %1206 = vmatpush2.bf16.msra.mxu0 0
    %1207 = vmatprep.subr.bf16.mxu0 0
    %1208 = vmatpush2.bf16.msra.mxu0 0
    %1209 = vmatprep.subr.bf16.mxu0 0
    %1210 = vmatpush2.bf16.msra.mxu0 0
    %1211 = vmatprep.subr.bf16.mxu0 0
    %1212 = vmatpush2.bf16.msra.mxu0 0
    %1213 = vmatprep.subr.bf16.mxu0 0
    %1214 = vmatpush2.bf16.msra.mxu0 0
    %1215 = vmatprep.subr.bf16.mxu0 0
    %1216 = vmatpush2.bf16.msra.mxu0 0
    %1217 = vmatprep.subr.bf16.mxu0 0
    %1218 = vmatpush2.bf16.msra.mxu0 0
    %1219 = vmatprep.mubr.bf16.mxu0 0
    %1220 = vmatmul.mubr.bf16.gmra.mxu0 %v1185
    %v1221 = vpop.f32.mrf.mxu0
    %v1222 = vadd.f32 %v1169, %v1221
    %v1223 = vpop.f32.mrf.mxu0
    %v1224 = vpop.f32.mrf.mxu0
    %v1225 = vpop.f32.mrf.mxu0
    %1226 = vdwg.mxu0
    %v1227 = vadd.f32 %v1222, %v48
    %v1228 = vxor.u32 %v1227, 2147483648
    %v1229 = vmul.f32 %v1228, 1.442695
    %v1230 = vpow.pop %v1229
    %v1231 = vadd.f32 %v1230, 1.0
    %v1232 = vrcp.pop %v1231
    %v1233 = vmul.f32 1.0, %v1232
    %v1234 = vtanh.pop %v1227
    %v1235 = vmul.f32 %v1233, %v1017
    %1237 = vrot.lane.b32.xlu0 %v1234, 68
    %v1238 = vpop.permute.xlu0 %1237
    %v1240 = vmul.f32 %v1233, %v1238
    %1242 = vrot.lane.b32.xlu0 %v1240, 20
    %v1243 = vpop.permute.xlu0 %1242
    %v1245 = vadd.f32 %v1235, %v1243
    %v1246 = vtanh.pop %v1245
    %1248 = vrot.lane.b32.xlu0 %v1246, 20
    %v1249 = vpop.permute.xlu0 %1248
    %v1251 = vmul.f32 %v1233, %v1249
    %1252 = vmatprep.subr.bf16.mxu0 0
    %1253 = vmatpush1.bf16.msra.mxu0 0
    %1254 = vmatprep.subr.bf16.mxu0 0
    %1255 = vmatpush1.bf16.msra.mxu0 0
    %1256 = vmatprep.subr.bf16.mxu0 0
    %1257 = vmatpush1.bf16.msra.mxu0 0
    %1258 = vmatprep.subr.bf16.mxu0 0
    %1259 = vmatpush1.bf16.msra.mxu0 0
    %1260 = vmatprep.subr.bf16.mxu0 0
    %1261 = vmatpush1.bf16.msra.mxu0 0
    %1262 = vmatprep.subr.bf16.mxu0 0
    %1263 = vmatpush1.bf16.msra.mxu0 0
    %1264 = vmatprep.subr.bf16.mxu0 0
    %1265 = vmatpush1.bf16.msra.mxu0 %v102
    %1266 = vmatprep.subr.bf16.mxu0 0
    %1267 = vmatpush1.bf16.msra.mxu0 %v93
    %1268 = vmatprep.subr.bf16.mxu0 0
    %1269 = vmatpush2.bf16.msra.mxu0 0
    %1270 = vmatprep.subr.bf16.mxu0 0
    %1271 = vmatpush2.bf16.msra.mxu0 0
    %1272 = vmatprep.subr.bf16.mxu0 0
    %1273 = vmatpush2.bf16.msra.mxu0 0
    %1274 = vmatprep.subr.bf16.mxu0 0
    %1275 = vmatpush2.bf16.msra.mxu0 0
    %1276 = vmatprep.subr.bf16.mxu0 0
    %1277 = vmatpush2.bf16.msra.mxu0 0
    %1278 = vmatprep.subr.bf16.mxu0 0
    %1279 = vmatpush2.bf16.msra.mxu0 0
    %1280 = vmatprep.subr.bf16.mxu0 0
    %1281 = vmatpush2.bf16.msra.mxu0 0
    %1282 = vmatprep.subr.bf16.mxu0 0
    %1283 = vmatpush2.bf16.msra.mxu0 0
    %1284 = vmatprep.mubr.bf16.mxu0 0
    %1285 = vmatmul.mubr.bf16.gmra.mxu0 %v1185
    %v1286 = vpop.f32.mrf.mxu0
    %v1287 = vadd.f32 0.0, %v1286
    %v1288 = vpop.f32.mrf.mxu0
    %v1289 = vpop.f32.mrf.mxu0
    %v1290 = vpop.f32.mrf.mxu0
    %1291 = vdwg.mxu0
    %v1293 = vrot.slane %v1287, 3
    %v1294 = vrot.slane %v1287, 4
    %v1297 = vadd.f32 %v85, %v1293
    %v1298 = vadd.f32 %v86, %v1294
    %v1299 = vxor.u32 %v1297, 2147483648
    %v1300 = vxor.u32 %v1298, 2147483648
    %v1301 = vmul.f32 %v1299, 1.442695
    %v1302 = vpow.pop %v1301
    %v1303 = vmul.f32 %v1300, 1.442695
    %v1304 = vpow.pop %v1303
    %v1305 = vadd.f32 %v1302, 1.0
    %v1306 = vadd.f32 %v1304, 1.0
    %v1307 = vrcp.pop %v1305
    %v1308 = vmul.f32 1.0, %v1307
    %v1309 = vrcp.pop %v1306
    %v1310 = vmul.f32 1.0, %v1309
    %v1311 = vtanh.pop %v1297
    %v1312 = vtanh.pop %v1298
    %v1315 = vrot.slane %v1111, 7
    %v1316 = vrot.slane %v1112, 7
    %v1319 = vmul.f32 %v1308, %v1315
    %v1320 = vmul.f32 %v1310, %v1316
    %1323 = vrot.lane.b32.xlu0 %v1311, 68
    %v1324 = vpop.permute.xlu0 %1323
    %1325 = vrot.lane.b32.xlu0 %v1312, 68
    %v1326 = vpop.permute.xlu0 %1325
    %v1329 = vmul.f32 %v1308, %v1324
    %v1330 = vmul.f32 %v1310, %v1326
    %1333 = vrot.lane.b32.xlu0 %v1329, 20
    %v1334 = vpop.permute.xlu0 %1333
    %1335 = vrot.lane.b32.xlu0 %v1330, 20
    %v1336 = vpop.permute.xlu0 %1335
    %v1339 = vadd.f32 %v1319, %v1334
    %v1340 = vadd.f32 %v1320, %v1336
    %v1341 = vtanh.pop %v1339
    %v1342 = vtanh.pop %v1340
    %1345 = vrot.lane.b32.xlu0 %v1341, 20
    %v1346 = vpop.permute.xlu0 %1345
    %1347 = vrot.lane.b32.xlu0 %v1342, 20
    %v1348 = vpop.permute.xlu0 %1347
    %v1351 = vmul.f32 %v1308, %v1346
    %v1352 = vmul.f32 %v1310, %v1348
    %v1353 = vpack.c.bf16 %v1351, %v1351
    %v1354 = vpack.c.bf16 %v1352, %v1352
    %v1355 = vpack.c.bf16 %v1251, %v1251
    %1357 = vrot.lane.b32.xlu0 %v1355, 88
    %v1358 = vpop.permute.xlu0 %1357
    %v1360 = vsel %vm96, %v1358, 0
    %1362 = vmatprep.subr.bf16.mxu0 0
    %1363 = vmatpush1.bf16.msra.mxu0 0
    %1364 = vmatprep.subr.bf16.mxu0 0
    %1365 = vmatpush1.bf16.msra.mxu0 0
    %1366 = vmatprep.subr.bf16.mxu0 0
    %1367 = vmatpush1.bf16.msra.mxu0 0
    %1368 = vmatprep.subr.bf16.mxu0 0
    %1369 = vmatpush1.bf16.msra.mxu0 0
    %1370 = vmatprep.subr.bf16.mxu0 0
    %1371 = vmatpush1.bf16.msra.mxu0 0
    %1372 = vmatprep.subr.bf16.mxu0 0
    %1373 = vmatpush1.bf16.msra.mxu0 0
    %1374 = vmatprep.subr.bf16.mxu0 0
    %1375 = vmatpush1.bf16.msra.mxu0 %v210
    %1376 = vmatprep.subr.bf16.mxu0 0
    %1377 = vmatpush1.bf16.msra.mxu0 %v206
    %1378 = vmatprep.subr.bf16.mxu0 0
    %1379 = vmatpush2.bf16.msra.mxu0 0
    %1380 = vmatprep.subr.bf16.mxu0 0
    %1381 = vmatpush2.bf16.msra.mxu0 0
    %1382 = vmatprep.subr.bf16.mxu0 0
    %1383 = vmatpush2.bf16.msra.mxu0 0
    %1384 = vmatprep.subr.bf16.mxu0 0
    %1385 = vmatpush2.bf16.msra.mxu0 0
    %1386 = vmatprep.subr.bf16.mxu0 0
    %1387 = vmatpush2.bf16.msra.mxu0 0
    %1388 = vmatprep.subr.bf16.mxu0 0
    %1389 = vmatpush2.bf16.msra.mxu0 0
    %1390 = vmatprep.subr.bf16.mxu0 0
    %1391 = vmatpush2.bf16.msra.mxu0 0
    %1392 = vmatprep.subr.bf16.mxu0 0
    %1393 = vmatpush2.bf16.msra.mxu0 0
    %1394 = vmatprep.mubr.bf16.mxu0 0
    %1395 = vmatmul.mubr.bf16.gmra.mxu0 %v1360
    %v1396 = vpop.f32.mrf.mxu0
    %v1397 = vadd.f32 0.0, %v1396
    %v1398 = vpop.f32.mrf.mxu0
    %v1399 = vpop.f32.mrf.mxu0
    %v1400 = vpop.f32.mrf.mxu0
    %1401 = vdwg.mxu0
    %v1404 = vunpack.c.l.b16 %v1353
    %v1405 = vunpack.c.l.b16 %v1354
    %v1406 = vrot.slane %v1404, 5
    %v1407 = vrot.slane %v1405, 4
    %v1408 = vsel %vm257, %v1407, %v1406
    %v1409 = vpack.c.b16 %v1408, %v1408
    %1410 = vrot.lane.b32.xlu0 %v1409, 88
    %v1411 = vpop.permute.xlu0 %1410
    %v1413 = vsel %vm96, %v1411, 0
    %1415 = vmatprep.subr.bf16.mxu0 0
    %1416 = vmatpush1.bf16.msra.mxu0 0
    %1417 = vmatprep.subr.bf16.mxu0 0
    %1418 = vmatpush1.bf16.msra.mxu0 0
    %1419 = vmatprep.subr.bf16.mxu0 0
    %1420 = vmatpush1.bf16.msra.mxu0 0
    %1421 = vmatprep.subr.bf16.mxu0 0
    %1422 = vmatpush1.bf16.msra.mxu0 0
    %1423 = vmatprep.subr.bf16.mxu0 0
    %1424 = vmatpush1.bf16.msra.mxu0 0
    %1425 = vmatprep.subr.bf16.mxu0 0
    %1426 = vmatpush1.bf16.msra.mxu0 0
    %1427 = vmatprep.subr.bf16.mxu0 0
    %1428 = vmatpush1.bf16.msra.mxu0 %v275
    %1429 = vmatprep.subr.bf16.mxu0 0
    %1430 = vmatpush1.bf16.msra.mxu0 %v268
    %1431 = vmatprep.subr.bf16.mxu0 0
    %1432 = vmatpush2.bf16.msra.mxu0 0
    %1433 = vmatprep.subr.bf16.mxu0 0
    %1434 = vmatpush2.bf16.msra.mxu0 0
    %1435 = vmatprep.subr.bf16.mxu0 0
    %1436 = vmatpush2.bf16.msra.mxu0 0
    %1437 = vmatprep.subr.bf16.mxu0 0
    %1438 = vmatpush2.bf16.msra.mxu0 0
    %1439 = vmatprep.subr.bf16.mxu0 0
    %1440 = vmatpush2.bf16.msra.mxu0 0
    %1441 = vmatprep.subr.bf16.mxu0 0
    %1442 = vmatpush2.bf16.msra.mxu0 0
    %1443 = vmatprep.subr.bf16.mxu0 0
    %1444 = vmatpush2.bf16.msra.mxu0 0
    %1445 = vmatprep.subr.bf16.mxu0 0
    %1446 = vmatpush2.bf16.msra.mxu0 0
    %1447 = vmatprep.mubr.bf16.mxu0 0
    %1448 = vmatmul.mubr.bf16.gmra.mxu0 %v1413
    %v1449 = vpop.f32.mrf.mxu0
    %v1450 = vadd.f32 %v1397, %v1449
    %v1451 = vpop.f32.mrf.mxu0
    %v1452 = vpop.f32.mrf.mxu0
    %v1453 = vpop.f32.mrf.mxu0
    %1454 = vdwg.mxu0
    %v1455 = vadd.f32 %v1450, %v48
    %v1456 = vxor.u32 %v1455, 2147483648
    %v1457 = vmul.f32 %v1456, 1.442695
    %v1458 = vpow.pop %v1457
    %v1459 = vadd.f32 %v1458, 1.0
    %v1460 = vrcp.pop %v1459
    %v1461 = vmul.f32 1.0, %v1460
    %v1462 = vtanh.pop %v1455
    %v1463 = vmul.f32 %v1461, %v1245
    %1465 = vrot.lane.b32.xlu0 %v1462, 68
    %v1466 = vpop.permute.xlu0 %1465
    %v1468 = vmul.f32 %v1461, %v1466
    %1470 = vrot.lane.b32.xlu0 %v1468, 20
    %v1471 = vpop.permute.xlu0 %1470
    %v1473 = vadd.f32 %v1463, %v1471
    %v1474 = vtanh.pop %v1473
    %1476 = vrot.lane.b32.xlu0 %v1474, 20
    %v1477 = vpop.permute.xlu0 %1476
    %v1479 = vmul.f32 %v1461, %v1477
    %1480 = vmatprep.subr.bf16.mxu0 0
    %1481 = vmatpush1.bf16.msra.mxu0 0
    %1482 = vmatprep.subr.bf16.mxu0 0
    %1483 = vmatpush1.bf16.msra.mxu0 0
    %1484 = vmatprep.subr.bf16.mxu0 0
    %1485 = vmatpush1.bf16.msra.mxu0 0
    %1486 = vmatprep.subr.bf16.mxu0 0
    %1487 = vmatpush1.bf16.msra.mxu0 0
    %1488 = vmatprep.subr.bf16.mxu0 0
    %1489 = vmatpush1.bf16.msra.mxu0 0
    %1490 = vmatprep.subr.bf16.mxu0 0
    %1491 = vmatpush1.bf16.msra.mxu0 0
    %1492 = vmatprep.subr.bf16.mxu0 0
    %1493 = vmatpush1.bf16.msra.mxu0 %v102
    %1494 = vmatprep.subr.bf16.mxu0 0
    %1495 = vmatpush1.bf16.msra.mxu0 %v93
    %1496 = vmatprep.subr.bf16.mxu0 0
    %1497 = vmatpush2.bf16.msra.mxu0 0
    %1498 = vmatprep.subr.bf16.mxu0 0
    %1499 = vmatpush2.bf16.msra.mxu0 0
    %1500 = vmatprep.subr.bf16.mxu0 0
    %1501 = vmatpush2.bf16.msra.mxu0 0
    %1502 = vmatprep.subr.bf16.mxu0 0
    %1503 = vmatpush2.bf16.msra.mxu0 0
    %1504 = vmatprep.subr.bf16.mxu0 0
    %1505 = vmatpush2.bf16.msra.mxu0 0
    %1506 = vmatprep.subr.bf16.mxu0 0
    %1507 = vmatpush2.bf16.msra.mxu0 0
    %1508 = vmatprep.subr.bf16.mxu0 0
    %1509 = vmatpush2.bf16.msra.mxu0 0
    %1510 = vmatprep.subr.bf16.mxu0 0
    %1511 = vmatpush2.bf16.msra.mxu0 0
    %1512 = vmatprep.mubr.bf16.mxu0 0
    %1513 = vmatmul.mubr.bf16.gmra.mxu0 %v1413
    %v1514 = vpop.f32.mrf.mxu0
    %v1515 = vadd.f32 0.0, %v1514
    %v1516 = vpop.f32.mrf.mxu0
    %v1517 = vpop.f32.mrf.mxu0
    %v1518 = vpop.f32.mrf.mxu0
    %1519 = vdwg.mxu0
    %v1521 = vrot.slane %v1515, 2
    %v1522 = vrot.slane %v1515, 3
    %v1525 = vadd.f32 %v85, %v1521
    %v1526 = vadd.f32 %v86, %v1522
    %v1527 = vxor.u32 %v1525, 2147483648
    %v1528 = vxor.u32 %v1526, 2147483648
    %v1529 = vmul.f32 %v1527, 1.442695
    %v1530 = vpow.pop %v1529
    %v1531 = vmul.f32 %v1528, 1.442695
    %v1532 = vpow.pop %v1531
    %v1533 = vadd.f32 %v1530, 1.0
    %v1534 = vadd.f32 %v1532, 1.0
    %v1535 = vrcp.pop %v1533
    %v1536 = vmul.f32 1.0, %v1535
    %v1537 = vrcp.pop %v1534
    %v1538 = vmul.f32 1.0, %v1537
    %v1539 = vtanh.pop %v1525
    %v1540 = vtanh.pop %v1526
    %v1543 = vrot.slane %v1339, 7
    %v1544 = vrot.slane %v1340, 7
    %v1547 = vmul.f32 %v1536, %v1543
    %v1548 = vmul.f32 %v1538, %v1544
    %1551 = vrot.lane.b32.xlu0 %v1539, 68
    %v1552 = vpop.permute.xlu0 %1551
    %1553 = vrot.lane.b32.xlu0 %v1540, 68
    %v1554 = vpop.permute.xlu0 %1553
    %v1557 = vmul.f32 %v1536, %v1552
    %v1558 = vmul.f32 %v1538, %v1554
    %1561 = vrot.lane.b32.xlu0 %v1557, 20
    %v1562 = vpop.permute.xlu0 %1561
    %1563 = vrot.lane.b32.xlu0 %v1558, 20
    %v1564 = vpop.permute.xlu0 %1563
    %v1567 = vadd.f32 %v1547, %v1562
    %v1568 = vadd.f32 %v1548, %v1564
    %v1569 = vtanh.pop %v1567
    %v1570 = vtanh.pop %v1568
    %1573 = vrot.lane.b32.xlu0 %v1569, 20
    %v1574 = vpop.permute.xlu0 %1573
    %1575 = vrot.lane.b32.xlu0 %v1570, 20
    %v1576 = vpop.permute.xlu0 %1575
    %v1579 = vmul.f32 %v1536, %v1574
    %v1580 = vmul.f32 %v1538, %v1576
    %v1581 = vpack.c.bf16 %v1579, %v1579
    %v1582 = vpack.c.bf16 %v1580, %v1580
    %v1583 = vpack.c.bf16 %v1479, %v1479
    %1585 = vrot.lane.b32.xlu0 %v1583, 88
    %v1586 = vpop.permute.xlu0 %1585
    %v1588 = vsel %vm96, %v1586, 0
    %1590 = vmatprep.subr.bf16.mxu0 0
    %1591 = vmatpush1.bf16.msra.mxu0 0
    %1592 = vmatprep.subr.bf16.mxu0 0
    %1593 = vmatpush1.bf16.msra.mxu0 0
    %1594 = vmatprep.subr.bf16.mxu0 0
    %1595 = vmatpush1.bf16.msra.mxu0 0
    %1596 = vmatprep.subr.bf16.mxu0 0
    %1597 = vmatpush1.bf16.msra.mxu0 0
    %1598 = vmatprep.subr.bf16.mxu0 0
    %1599 = vmatpush1.bf16.msra.mxu0 0
    %1600 = vmatprep.subr.bf16.mxu0 0
    %1601 = vmatpush1.bf16.msra.mxu0 0
    %1602 = vmatprep.subr.bf16.mxu0 0
    %1603 = vmatpush1.bf16.msra.mxu0 %v210
    %1604 = vmatprep.subr.bf16.mxu0 0
    %1605 = vmatpush1.bf16.msra.mxu0 %v206
    %1606 = vmatprep.subr.bf16.mxu0 0
    %1607 = vmatpush2.bf16.msra.mxu0 0
    %1608 = vmatprep.subr.bf16.mxu0 0
    %1609 = vmatpush2.bf16.msra.mxu0 0
    %1610 = vmatprep.subr.bf16.mxu0 0
    %1611 = vmatpush2.bf16.msra.mxu0 0
    %1612 = vmatprep.subr.bf16.mxu0 0
    %1613 = vmatpush2.bf16.msra.mxu0 0
    %1614 = vmatprep.subr.bf16.mxu0 0
    %1615 = vmatpush2.bf16.msra.mxu0 0
    %1616 = vmatprep.subr.bf16.mxu0 0
    %1617 = vmatpush2.bf16.msra.mxu0 0
    %1618 = vmatprep.subr.bf16.mxu0 0
    %1619 = vmatpush2.bf16.msra.mxu0 0
    %1620 = vmatprep.subr.bf16.mxu0 0
    %1621 = vmatpush2.bf16.msra.mxu0 0
    %1622 = vmatprep.mubr.bf16.mxu0 0
    %1623 = vmatmul.mubr.bf16.gmra.mxu0 %v1588
    %v1624 = vpop.f32.mrf.mxu0
    %v1625 = vadd.f32 0.0, %v1624
    %v1626 = vpop.f32.mrf.mxu0
    %v1627 = vpop.f32.mrf.mxu0
    %v1628 = vpop.f32.mrf.mxu0
    %1629 = vdwg.mxu0
    %v1632 = vunpack.c.l.b16 %v1581
    %v1633 = vunpack.c.l.b16 %v1582
    %v1634 = vrot.slane %v1632, 6
    %v1635 = vrot.slane %v1633, 5
    %v1636 = vsel %vm257, %v1635, %v1634
    %v1637 = vpack.c.b16 %v1636, %v1636
    %1638 = vrot.lane.b32.xlu0 %v1637, 88
    %v1639 = vpop.permute.xlu0 %1638
    %v1641 = vsel %vm96, %v1639, 0
    %1643 = vmatprep.subr.bf16.mxu0 0
    %1644 = vmatpush1.bf16.msra.mxu0 0
    %1645 = vmatprep.subr.bf16.mxu0 0
    %1646 = vmatpush1.bf16.msra.mxu0 0
    %1647 = vmatprep.subr.bf16.mxu0 0
    %1648 = vmatpush1.bf16.msra.mxu0 0
    %1649 = vmatprep.subr.bf16.mxu0 0
    %1650 = vmatpush1.bf16.msra.mxu0 0
    %1651 = vmatprep.subr.bf16.mxu0 0
    %1652 = vmatpush1.bf16.msra.mxu0 0
    %1653 = vmatprep.subr.bf16.mxu0 0
    %1654 = vmatpush1.bf16.msra.mxu0 0
    %1655 = vmatprep.subr.bf16.mxu0 0
    %1656 = vmatpush1.bf16.msra.mxu0 %v275
    %1657 = vmatprep.subr.bf16.mxu0 0
    %1658 = vmatpush1.bf16.msra.mxu0 %v268
    %1659 = vmatprep.subr.bf16.mxu0 0
    %1660 = vmatpush2.bf16.msra.mxu0 0
    %1661 = vmatprep.subr.bf16.mxu0 0
    %1662 = vmatpush2.bf16.msra.mxu0 0
    %1663 = vmatprep.subr.bf16.mxu0 0
    %1664 = vmatpush2.bf16.msra.mxu0 0
    %1665 = vmatprep.subr.bf16.mxu0 0
    %1666 = vmatpush2.bf16.msra.mxu0 0
    %1667 = vmatprep.subr.bf16.mxu0 0
    %1668 = vmatpush2.bf16.msra.mxu0 0
    %1669 = vmatprep.subr.bf16.mxu0 0
    %1670 = vmatpush2.bf16.msra.mxu0 0
    %1671 = vmatprep.subr.bf16.mxu0 0
    %1672 = vmatpush2.bf16.msra.mxu0 0
    %1673 = vmatprep.subr.bf16.mxu0 0
    %1674 = vmatpush2.bf16.msra.mxu0 0
    %1675 = vmatprep.mubr.bf16.mxu0 0
    %1676 = vmatmul.mubr.bf16.gmra.mxu0 %v1641
    %v1677 = vpop.f32.mrf.mxu0
    %v1678 = vadd.f32 %v1625, %v1677
    %v1679 = vpop.f32.mrf.mxu0
    %v1680 = vpop.f32.mrf.mxu0
    %v1681 = vpop.f32.mrf.mxu0
    %1682 = vdwg.mxu0
    %v1683 = vadd.f32 %v1678, %v48
    %v1684 = vxor.u32 %v1683, 2147483648
    %v1685 = vmul.f32 %v1684, 1.442695
    %v1686 = vpow.pop %v1685
    %v1687 = vadd.f32 %v1686, 1.0
    %v1688 = vrcp.pop %v1687
    %v1689 = vmul.f32 1.0, %v1688
    %v1690 = vtanh.pop %v1683
    %v1691 = vmul.f32 %v1689, %v1473
    %1693 = vrot.lane.b32.xlu0 %v1690, 68
    %v1694 = vpop.permute.xlu0 %1693
    %v1696 = vmul.f32 %v1689, %v1694
    %1698 = vrot.lane.b32.xlu0 %v1696, 20
    %v1699 = vpop.permute.xlu0 %1698
    %v1701 = vadd.f32 %v1691, %v1699
    %v1702 = vtanh.pop %v1701
    %1704 = vrot.lane.b32.xlu0 %v1702, 20
    %v1705 = vpop.permute.xlu0 %1704
    %v1707 = vmul.f32 %v1689, %v1705
    %1708 = vmatprep.subr.bf16.mxu0 0
    %1709 = vmatpush1.bf16.msra.mxu0 0
    %1710 = vmatprep.subr.bf16.mxu0 0
    %1711 = vmatpush1.bf16.msra.mxu0 0
    %1712 = vmatprep.subr.bf16.mxu0 0
    %1713 = vmatpush1.bf16.msra.mxu0 0
    %1714 = vmatprep.subr.bf16.mxu0 0
    %1715 = vmatpush1.bf16.msra.mxu0 0
    %1716 = vmatprep.subr.bf16.mxu0 0
    %1717 = vmatpush1.bf16.msra.mxu0 0
    %1718 = vmatprep.subr.bf16.mxu0 0
    %1719 = vmatpush1.bf16.msra.mxu0 0
    %1720 = vmatprep.subr.bf16.mxu0 0
    %1721 = vmatpush1.bf16.msra.mxu0 %v102
    %1722 = vmatprep.subr.bf16.mxu0 0
    %1723 = vmatpush1.bf16.msra.mxu0 %v93
    %1724 = vmatprep.subr.bf16.mxu0 0
    %1725 = vmatpush2.bf16.msra.mxu0 0
    %1726 = vmatprep.subr.bf16.mxu0 0
    %1727 = vmatpush2.bf16.msra.mxu0 0
    %1728 = vmatprep.subr.bf16.mxu0 0
    %1729 = vmatpush2.bf16.msra.mxu0 0
    %1730 = vmatprep.subr.bf16.mxu0 0
    %1731 = vmatpush2.bf16.msra.mxu0 0
    %1732 = vmatprep.subr.bf16.mxu0 0
    %1733 = vmatpush2.bf16.msra.mxu0 0
    %1734 = vmatprep.subr.bf16.mxu0 0
    %1735 = vmatpush2.bf16.msra.mxu0 0
    %1736 = vmatprep.subr.bf16.mxu0 0
    %1737 = vmatpush2.bf16.msra.mxu0 0
    %1738 = vmatprep.subr.bf16.mxu0 0
    %1739 = vmatpush2.bf16.msra.mxu0 0
    %1740 = vmatprep.mubr.bf16.mxu0 0
    %1741 = vmatmul.mubr.bf16.gmra.mxu0 %v1641
    %v1742 = vpop.f32.mrf.mxu0
    %v1743 = vadd.f32 0.0, %v1742
    %v1744 = vpop.f32.mrf.mxu0
    %v1745 = vpop.f32.mrf.mxu0
    %v1746 = vpop.f32.mrf.mxu0
    %1747 = vdwg.mxu0
    %v1749 = vrot.slane %v1743, 1
    %v1750 = vrot.slane %v1743, 2
    %v1753 = vadd.f32 %v85, %v1749
    %v1754 = vadd.f32 %v86, %v1750
    %v1755 = vxor.u32 %v1753, 2147483648
    %v1756 = vxor.u32 %v1754, 2147483648
    %v1757 = vmul.f32 %v1755, 1.442695
    %v1758 = vpow.pop %v1757
    %v1759 = vmul.f32 %v1756, 1.442695
    %v1760 = vpow.pop %v1759
    %v1761 = vadd.f32 %v1758, 1.0
    %v1762 = vadd.f32 %v1760, 1.0
    %v1763 = vrcp.pop %v1761
    %v1764 = vmul.f32 1.0, %v1763
    %v1765 = vrcp.pop %v1762
    %v1766 = vmul.f32 1.0, %v1765
    %v1767 = vtanh.pop %v1753
    %v1768 = vtanh.pop %v1754
    %v1771 = vrot.slane %v1567, 7
    %v1772 = vrot.slane %v1568, 7
    %v1775 = vmul.f32 %v1764, %v1771
    %v1776 = vmul.f32 %v1766, %v1772
    %1779 = vrot.lane.b32.xlu0 %v1767, 68
    %v1780 = vpop.permute.xlu0 %1779
    %1781 = vrot.lane.b32.xlu0 %v1768, 68
    %v1782 = vpop.permute.xlu0 %1781
    %v1785 = vmul.f32 %v1764, %v1780
    %v1786 = vmul.f32 %v1766, %v1782
    %1789 = vrot.lane.b32.xlu0 %v1785, 20
    %v1790 = vpop.permute.xlu0 %1789
    %1791 = vrot.lane.b32.xlu0 %v1786, 20
    %v1792 = vpop.permute.xlu0 %1791
    %v1795 = vadd.f32 %v1775, %v1790
    %v1796 = vadd.f32 %v1776, %v1792
    %v1797 = vtanh.pop %v1795
    %v1798 = vtanh.pop %v1796
    %1801 = vrot.lane.b32.xlu0 %v1797, 20
    %v1802 = vpop.permute.xlu0 %1801
    %1803 = vrot.lane.b32.xlu0 %v1798, 20
    %v1804 = vpop.permute.xlu0 %1803
    %v1807 = vmul.f32 %v1764, %v1802
    %v1808 = vmul.f32 %v1766, %v1804
    %v1809 = vpack.c.bf16 %v1807, %v1807
    %v1810 = vpack.c.bf16 %v1808, %v1808
    %v1811 = vpack.c.bf16 %v1707, %v1707
    %1813 = vrot.lane.b32.xlu0 %v1811, 88
    %v1814 = vpop.permute.xlu0 %1813
    %v1816 = vsel %vm96, %v1814, 0
    %1818 = vmatprep.subr.bf16.mxu0 0
    %1819 = vmatpush1.bf16.msra.mxu0 0
    %1820 = vmatprep.subr.bf16.mxu0 0
    %1821 = vmatpush1.bf16.msra.mxu0 0
    %1822 = vmatprep.subr.bf16.mxu0 0
    %1823 = vmatpush1.bf16.msra.mxu0 0
    %1824 = vmatprep.subr.bf16.mxu0 0
    %1825 = vmatpush1.bf16.msra.mxu0 0
    %1826 = vmatprep.subr.bf16.mxu0 0
    %1827 = vmatpush1.bf16.msra.mxu0 0
    %1828 = vmatprep.subr.bf16.mxu0 0
    %1829 = vmatpush1.bf16.msra.mxu0 0
    %1830 = vmatprep.subr.bf16.mxu0 0
    %1831 = vmatpush1.bf16.msra.mxu0 %v210
    %1832 = vmatprep.subr.bf16.mxu0 0
    %1833 = vmatpush1.bf16.msra.mxu0 %v206
    %1834 = vmatprep.subr.bf16.mxu0 0
    %1835 = vmatpush2.bf16.msra.mxu0 0
    %1836 = vmatprep.subr.bf16.mxu0 0
    %1837 = vmatpush2.bf16.msra.mxu0 0
    %1838 = vmatprep.subr.bf16.mxu0 0
    %1839 = vmatpush2.bf16.msra.mxu0 0
    %1840 = vmatprep.subr.bf16.mxu0 0
    %1841 = vmatpush2.bf16.msra.mxu0 0
    %1842 = vmatprep.subr.bf16.mxu0 0
    %1843 = vmatpush2.bf16.msra.mxu0 0
    %1844 = vmatprep.subr.bf16.mxu0 0
    %1845 = vmatpush2.bf16.msra.mxu0 0
    %1846 = vmatprep.subr.bf16.mxu0 0
    %1847 = vmatpush2.bf16.msra.mxu0 0
    %1848 = vmatprep.subr.bf16.mxu0 0
    %1849 = vmatpush2.bf16.msra.mxu0 0
    %1850 = vmatprep.mubr.bf16.mxu0 0
    %1851 = vmatmul.mubr.bf16.gmra.mxu0 %v1816
    %v1852 = vpop.f32.mrf.mxu0
    %v1853 = vadd.f32 0.0, %v1852
    %v1854 = vpop.f32.mrf.mxu0
    %v1855 = vpop.f32.mrf.mxu0
    %v1856 = vpop.f32.mrf.mxu0
    %1857 = vdwg.mxu0
    %v1860 = vunpack.c.l.b16 %v1809
    %v1861 = vunpack.c.l.b16 %v1810
    %v1862 = vrot.slane %v1860, 7
    %v1863 = vrot.slane %v1861, 6
    %v1864 = vsel %vm257, %v1863, %v1862
    %v1865 = vpack.c.b16 %v1864, %v1864
    %1866 = vrot.lane.b32.xlu0 %v1865, 88
    %v1867 = vpop.permute.xlu0 %1866
    %v1869 = vsel %vm96, %v1867, 0
    %1871 = vmatprep.subr.bf16.mxu0 0
    %1872 = vmatpush1.bf16.msra.mxu0 0
    %1873 = vmatprep.subr.bf16.mxu0 0
    %1874 = vmatpush1.bf16.msra.mxu0 0
    %1875 = vmatprep.subr.bf16.mxu0 0
    %1876 = vmatpush1.bf16.msra.mxu0 0
    %1877 = vmatprep.subr.bf16.mxu0 0
    %1878 = vmatpush1.bf16.msra.mxu0 0
    %1879 = vmatprep.subr.bf16.mxu0 0
    %1880 = vmatpush1.bf16.msra.mxu0 0
    %1881 = vmatprep.subr.bf16.mxu0 0
    %1882 = vmatpush1.bf16.msra.mxu0 0
    %1883 = vmatprep.subr.bf16.mxu0 0
    %1884 = vmatpush1.bf16.msra.mxu0 %v275
    %1885 = vmatprep.subr.bf16.mxu0 0
    %1886 = vmatpush1.bf16.msra.mxu0 %v268
    %1887 = vmatprep.subr.bf16.mxu0 0
    %1888 = vmatpush2.bf16.msra.mxu0 0
    %1889 = vmatprep.subr.bf16.mxu0 0
    %1890 = vmatpush2.bf16.msra.mxu0 0
    %1891 = vmatprep.subr.bf16.mxu0 0
    %1892 = vmatpush2.bf16.msra.mxu0 0
    %1893 = vmatprep.subr.bf16.mxu0 0
    %1894 = vmatpush2.bf16.msra.mxu0 0
    %1895 = vmatprep.subr.bf16.mxu0 0
    %1896 = vmatpush2.bf16.msra.mxu0 0
    %1897 = vmatprep.subr.bf16.mxu0 0
    %1898 = vmatpush2.bf16.msra.mxu0 0
    %1899 = vmatprep.subr.bf16.mxu0 0
    %1900 = vmatpush2.bf16.msra.mxu0 0
    %1901 = vmatprep.subr.bf16.mxu0 0
    %1902 = vmatpush2.bf16.msra.mxu0 0
    %1903 = vmatprep.mubr.bf16.mxu0 0
    %1904 = vmatmul.mubr.bf16.gmra.mxu0 %v1869
    %v1905 = vpop.f32.mrf.mxu0
    %v1906 = vadd.f32 %v1853, %v1905
    %v1907 = vpop.f32.mrf.mxu0
    %v1908 = vpop.f32.mrf.mxu0
    %v1909 = vpop.f32.mrf.mxu0
    %1910 = vdwg.mxu0
    %v1911 = vadd.f32 %v1906, %v48
    %v1912 = vxor.u32 %v1911, 2147483648
    %v1913 = vmul.f32 %v1912, 1.442695
    %v1914 = vpow.pop %v1913
    %v1915 = vadd.f32 %v1914, 1.0
    %v1916 = vrcp.pop %v1915
    %v1917 = vmul.f32 1.0, %v1916
    %v1918 = vtanh.pop %v1911
    %v1919 = vmul.f32 %v1917, %v1701
    %1921 = vrot.lane.b32.xlu0 %v1918, 68
    %v1922 = vpop.permute.xlu0 %1921
    %v1924 = vmul.f32 %v1917, %v1922
    %1926 = vrot.lane.b32.xlu0 %v1924, 20
    %v1927 = vpop.permute.xlu0 %1926
    %v1929 = vadd.f32 %v1919, %v1927
    %v1930 = vtanh.pop %v1929
    %1932 = vrot.lane.b32.xlu0 %v1930, 20
    %v1933 = vpop.permute.xlu0 %1932
    %v1935 = vmul.f32 %v1917, %v1933
    %v1936 = vpack.c.bf16 %v1935, %v1935
    %v1937 = vld [vmem:[%s7] sm:$0xf]
    %v1938 = vld [vmem:[%s7 + $0x4] sm:$0xf]
    %v1939 = vld [vmem:[%s7 + $0x8] sm:$0x3]
    %1941 = vrot.lane.b32.xlu0 %v1936, 88
    %v1942 = vpop.permute.xlu0 %1941
    %v1946 = vunpack.c.l.b16 %v1937
    %v1947 = vunpack.c.l.b16 %v1938
    %v1948 = vunpack.c.l.b16 %v1939
    %v1949 = vpack.c.b16 %v1947, %v1946
    %v1950 = vpack.c.b16 %v1948, %v1948
    %v1953 = vsel %vm96, %v1942, 0
    %v1956 = vsel %vm100, %v1950, 0
    %1958 = vmatprep.subr.bf16.mxu0 0
    %1959 = vmatpush1.bf16.msra.mxu0 0
    %1960 = vmatprep.subr.bf16.mxu0 0
    %1961 = vmatpush1.bf16.msra.mxu0 0
    %1962 = vmatprep.subr.bf16.mxu0 0
    %1963 = vmatpush1.bf16.msra.mxu0 0
    %1964 = vmatprep.subr.bf16.mxu0 0
    %1965 = vmatpush1.bf16.msra.mxu0 0
    %1966 = vmatprep.subr.bf16.mxu0 0
    %1967 = vmatpush1.bf16.msra.mxu0 0
    %1968 = vmatprep.subr.bf16.mxu0 0
    %1969 = vmatpush1.bf16.msra.mxu0 0
    %1970 = vmatprep.subr.bf16.mxu0 0
    %1971 = vmatpush1.bf16.msra.mxu0 %v1956
    %1972 = vmatprep.subr.bf16.mxu0 0
    %1973 = vmatpush1.bf16.msra.mxu0 %v1949
    %1974 = vmatprep.subr.bf16.mxu0 0
    %1975 = vmatpush2.bf16.msra.mxu0 0
    %1976 = vmatprep.subr.bf16.mxu0 0
    %1977 = vmatpush2.bf16.msra.mxu0 0
    %1978 = vmatprep.subr.bf16.mxu0 0
    %1979 = vmatpush2.bf16.msra.mxu0 0
    %1980 = vmatprep.subr.bf16.mxu0 0
    %1981 = vmatpush2.bf16.msra.mxu0 0
    %1982 = vmatprep.subr.bf16.mxu0 0
    %1983 = vmatpush2.bf16.msra.mxu0 0
    %1984 = vmatprep.subr.bf16.mxu0 0
    %1985 = vmatpush2.bf16.msra.mxu0 0
    %1986 = vmatprep.subr.bf16.mxu0 0
    %1987 = vmatpush2.bf16.msra.mxu0 0
    %1988 = vmatprep.subr.bf16.mxu0 0
    %1989 = vmatpush2.bf16.msra.mxu0 0
    %1990 = vmatprep.mubr.bf16.mxu0 0
    %1991 = vmatmul.mubr.bf16.gmra.mxu0 %v1953
    %v1992 = vpop.f32.mrf.mxu0
    %v1993 = vadd.f32 %v55, %v1992
    %v1994 = vpop.f32.mrf.mxu0
    %v1995 = vpop.f32.mrf.mxu0
    %v1996 = vpop.f32.mrf.mxu0
    %1997 = vdwg.mxu0
    %vm1998 = vcmask 115712
    %1999 = vst.msk [vmem:[#allocation2] sm:$0x3] %vm1998, %v1993
    // Predicated region
    $region38: #{lstm_forward.1} parent=1 // pred_check
      _
    $region39: #{lstm_forward.1} parent=1 // pred_check_branch
      %2001 = sbr.rel (0) target = $region41
    $region40: #{lstm_forward.1} parent=1 // pred_region
      %s2003 = ssub.s32 32, 32
      %2004 = vsyncadd [#allocation3], %s2003
      %s2006 = sshll.u32 [#allocation2], 4
      %s2007 = int_to_ptr.vmem [resolvable:$true] %s2006
      %2009 = dma.vmem_to_hbm [thread:$0]  %s2007, 32, %s9, [#allocation3]
    $region41: #{lstm_forward.1} parent=1 // pred_fallthru
      _
    // Predicated region
    $region42: #{lstm_forward.1} parent=1 // pred_check
      _
    $region43: #{lstm_forward.1} parent=1 // pred_check_branch
      %2011 = sbr.rel (0) target = $region45
    $region44: #{lstm_forward.1} parent=1 // pred_region
      %2012 = dma.done [#allocation3], 32
    $region45: #{lstm_forward.1} parent=1 // pred_fallthru
      _
    %2013 = vsyncpa [#allocation3], 1

</llo_original>
